<compile_context>
chip_gen: v6e
topology: v6e:2x2x1
jax: 0.10.0
libtpu: 0.0.40
codegen_flags: <defaults>
</compile_context>

<pallas_src>
import numpy as np
import jax
import jax.numpy as jnp
from jax.experimental import pallas as pl
from jax.experimental.pallas import tpu as pltpu

SZ = 16   # module default is 512; small spatial size for the demo
K = 4


# ----------------------------------------------------------------------------
# Host-side (NumPy) "parameter setup": replicate _find_idx.
# The KD-tree query depends only on the mask pattern, so it is a deterministic,
# data-independent precomputation (glue), not part of the hot path.
# ----------------------------------------------------------------------------
def _norm_coord(idx, sz):
    # Any uniform scaling leaves the IDW weights (ratios of distances) and the
    # k-NN order unchanged.
    return idx.astype(np.float64) / sz * 2.0 - 1.0


def _knn(filled, unfilled, sz, k):
    """Brute-force k-NN (deterministic stable tie-breaking) == KDTree.query(k)."""
    fn = _norm_coord(filled, sz)
    un = _norm_coord(unfilled, sz)
    d2 = ((un[:, None, :] - fn[None, :, :]) ** 2).sum(-1)          # (U, F)
    order = np.argsort(d2, axis=1, kind="stable")[:, :k]           # (U, k)
    dist = np.sqrt(np.take_along_axis(d2, order, axis=1))          # (U, k)
    # TODO(synk): scipy.cKDTree may break exact-distance ties differently; equal
    # distances get equal weights, but the gathered neighbor value can differ.
    return order.astype(np.int32), dist


def _bayer_masks(sz):
    r = np.zeros((sz, sz), np.float32); r[::2, ::2] = 1.0
    b = np.zeros((sz, sz), np.float32); b[1::2, 1::2] = 1.0
    g = np.zeros((sz, sz), np.float32); g[0::2, 1::2] = 1.0; g[1::2, 0::2] = 1.0
    return [r, g, b]   # output channel order: (red, green, blue)


def _build_stencil(sz, k):
    """Per-channel, per-offset weight planes.

    Returns (offsets, W, pad) with
      offsets: sorted list of (dy, dx) displacements (union over channels, incl. (0,0))
      W:       (3, n_off, sz, sz) f32, W[c,o,y,x] = weight of img[y+dy_o, x+dx_o]
      pad:     max |offset| component (halo width).
    Filled pixels get weight 1 at offset (0,0) (pass-through of coded*mask == coded).
    """
    masks = _bayer_masks(sz)
    chans = []
    offset_set = {(0, 0)}
    for m in masks:
        filled = np.argwhere(m != 0)        # lexicographic, same as torch.nonzero
        unfilled = np.argwhere(m == 0)
        idx, dist = _knn(filled, unfilled, sz, k)
        inv = 1.0 / dist
        w = inv / inv.sum(axis=1, keepdims=True)            # (U, k) IDW weights
        nbr = filled[idx]                                    # (U, k, 2)
        doff = nbr - unfilled[:, None, :]                    # (U, k, 2) displacements
        offset_set.update(map(tuple, doff.reshape(-1, 2).tolist()))
        chans.append((filled, unfilled, doff, w))

    offsets = sorted(offset_set)
    oid = {o: i for i, o in enumerate(offsets)}
    n_off = len(offsets)

    W = np.zeros((3, n_off, sz, sz), np.float32)
    for c, (filled, unfilled, doff, w) in enumerate(chans):
        W[c, oid[(0, 0)], filled[:, 0], filled[:, 1]] = 1.0   # pass-through
        oidx = np.array([[oid[(int(dy), int(dx))] for dy, dx in row] for row in doff],
                        dtype=np.int64)                       # (U, k)
        np.add.at(
            W[c],
            (oidx.ravel(),
             np.repeat(unfilled[:, 0], k),
             np.repeat(unfilled[:, 1], k)),
            w.astype(np.float32).ravel(),
        )
    pad = max(max(abs(dy), abs(dx)) for (dy, dx) in offsets)
    return offsets, W, pad


# ----------------------------------------------------------------------------
# Pallas kernel builder.
# ----------------------------------------------------------------------------
def make_tree_multi_quad(sz=SZ, k=K, row_tile=None, weight_dtype=jnp.bfloat16):
    assert sz % 2 == 0, "Bayer pattern requires even spatial size"
    offsets, W, pad = _build_stencil(sz, k)
    n_off = len(offsets)

    # Per-channel static pruning of all-zero weight planes (each channel only uses
    # a subset of the union offset list).
    active = []
    for c in range(3):
        act = tuple(int(o) for o in range(n_off) if np.any(W[c, o]))
        active.append(act)
    total_act = sum(len(a) for a in active)

    # ---------------- lane-dense working layout ----------------
    # Flatten (y, x) -> (R, L) with L a multiple of 128 whenever possible so that
    # stores are unmasked, full-width vst.  For sz % 128 == 0 this is the natural
    # 2-D layout; for the small demo (sz=16) it packs pixels into 256-wide rows.
    P = sz * sz
    if sz % 128 == 0:
        L = sz
    else:
        L = next((c for c in (2048, 1024, 512, 256, 128) if P % c == 0), sz)
    R = P // L

    # Row-tile choice: rt=64 at sz=512 gives grid=(8,) -> 4 steps per TensorCore on
    # v7x (balanced megacore split, enough steps for double-buffer overlap) while the
    # double-buffered blocks stay well inside v7x's 32 MiB scoped VMEM.
    if row_tile is None:
        row_tile = R if R <= 64 else 64
    row_tile = min(row_tile, R)
    assert R % row_tile == 0 and (row_tile % 8 == 0 or row_tile == R)
    n_rt = R // row_tile

    w_item = jnp.dtype(weight_dtype).itemsize
    block_bytes = row_tile * L * (n_off * 4 + total_act * w_item + 3 * 4)
    # Double-buffered blocks + headroom; capped below the v7x physical budget.
    vmem_limit = int(min(max(2.5 * block_bytes + (1 << 20), 32 << 20), 48 << 20))

    cost = pl.CostEstimate(
        flops=2 * total_act * P,
        transcendentals=0,
        bytes_accessed=P * (n_off * 4 + total_act * w_item + 3 * 4),
    )

    def kernel(x_ref, w_r_ref, w_g_ref, w_b_ref, o_ref):
        # x_ref:   (n_off, row_tile, L)   f32 shifted-image planes (shared by channels)
        # w_*_ref: (n_act_c, row_tile, L) per-channel compacted weight planes
        # o_ref:   (3, row_tile, L)       f32 output (r, g, b)
        w_refs = (w_r_ref, w_g_ref, w_b_ref)
        for c in range(3):                           # channel fusion: static unroll
            act = active[c]
            acc = w_refs[c][0].astype(jnp.float32) * x_ref[act[0]]
            for j in range(1, len(act)):             # static unroll, pruned planes only
                acc = acc + w_refs[c][j].astype(jnp.float32) * x_ref[act[j]]
            o_ref[c] = acc

    x_spec = pl.BlockSpec((n_off, row_tile, L), lambda g: (0, g, 0))
    w_specs = [pl.BlockSpec((len(act), row_tile, L), lambda g: (0, g, 0))
               for act in active]
    o_spec = pl.BlockSpec((3, row_tile, L), lambda g: (0, g, 0))

    @jax.jit
    def forward(coded, w_r, w_g, w_b):
        """coded: (1, 1, sz, sz) -> (1, 3, sz, sz)."""
        img = coded[0, 0].astype(jnp.float32)
        # Glue: build the n_off shifted copies of the image (halo handling done here
        # so the kernel needs only aligned, blocked accesses).
        # TODO(synk): replace with in-kernel halo shifting on the idle XLU to remove
        # this extra (n_off, sz, sz) HBM round-trip (perf-review item 7).
        xp = jnp.pad(img, ((pad, pad), (pad, pad)))
        planes = jnp.stack(
            [xp[pad + dy: pad + dy + sz, pad + dx: pad + dx + sz]
             for (dy, dx) in offsets],
            axis=0,
        ).reshape(n_off, R, L)                       # lane-dense working layout

        out = pl.pallas_call(
            kernel,
            out_shape=jax.ShapeDtypeStruct((3, R, L), jnp.float32),
            grid=(n_rt,),                            # single parallel axis: row tiles
            in_specs=[x_spec] + w_specs,
            out_specs=o_spec,
            compiler_params=pltpu.CompilerParams(
                dimension_semantics=("parallel",),
                vmem_limit_bytes=vmem_limit,
            ),
            cost_estimate=cost,
        )(planes, w_r, w_g, w_b)
        return out.reshape(3, sz, sz)[None]          # (1, 3, sz, sz)

    # Compacted per-channel weight planes in the requested storage dtype
    # (bf16 halves the dominant HBM stream; kernel math stays f32).
    weights = tuple(
        jnp.asarray(W[c][list(act)].reshape(len(act), R, L), dtype=weight_dtype)
        for c, act in enumerate(active)
    )
    return forward, weights


# ----------------------------------------------------------------------------
# Pure NumPy reference (direct translation of _fill) for validation.
# ----------------------------------------------------------------------------
def _direct_fill(img, mask, sz, k):
    holed = img * mask
    filled = np.argwhere(mask != 0)
    unfilled = np.argwhere(mask == 0)
    idx, dist = _knn(filled, unfilled, sz, k)
    vals = np.zeros(unfilled.shape[0], np.float64)
    for i in range(k):
        sel = filled[idx[:, i]]
        vals += holed[sel[:, 0], sel[:, 1]] * (1.0 / dist[:, i])
    vals /= (1.0 / dist).sum(axis=1)
    out = holed.astype(np.float64).copy()
    out[unfilled[:, 0], unfilled[:, 1]] = vals
    return out.astype(np.float32)


if __name__ == "__main__":
    key = jax.random.PRNGKey(0)
    coded = jax.random.normal(key, (1, 1, SZ, SZ), dtype=jnp.float32)

    # Production path: bf16 weight stream.
    fwd_bf16, w_bf16 = make_tree_multi_quad(SZ, K, weight_dtype=jnp.bfloat16)
    out_bf16 = jax.block_until_ready(fwd_bf16(coded, *w_bf16))

    # f32 weight path for tight numerical validation of the kernel itself.
    fwd_f32, w_f32 = make_tree_multi_quad(SZ, K, weight_dtype=jnp.float32)
    out_f32 = jax.block_until_ready(fwd_f32(coded, *w_f32))

    # Validate against a direct NumPy translation of the PyTorch forward.
    img = np.asarray(coded)[0, 0]
    ref = np.stack([_direct_fill(img, m, SZ, K) for m in _bayer_masks(SZ)], axis=0)[None]
    assert out_f32.shape == (1, 3, SZ, SZ) and out_bf16.shape == (1, 3, SZ, SZ)
    np.testing.assert_allclose(np.asarray(out_f32), ref, rtol=1e-4, atol=1e-4)
    # bf16 weight quantization introduces ~2e-3 relative error in the IDW weights.
    np.testing.assert_allclose(np.asarray(out_bf16), ref, rtol=5e-2, atol=5e-2)

    print("KERNEL_OK")
</pallas_src>

<mosaic_0001>
module attributes {stable_mosaic.version = 11 : i64} {
  func.func @kernel(%arg0: i32, %arg1: memref<39x1x256xf32, #tpu.memory_space<vmem>>, %arg2: memref<28x1x256xbf16, #tpu.memory_space<vmem>>, %arg3: memref<11x1x256xbf16, #tpu.memory_space<vmem>>, %arg4: memref<30x1x256xbf16, #tpu.memory_space<vmem>>, %arg5: memref<3x1x256xf32, #tpu.memory_space<vmem>>) attributes {dimension_semantics = [#tpu.dimension_semantics<parallel>], iteration_bounds = array<i64: 1>, scalar_prefetch = 0 : i64, scratch_operands = 0 : i64, tpu.core_type = #tpu.core_type<tc>, window_params = [{transform_indices = @transform_0, window_bounds = array<i64: 39, 1, 256>}, {transform_indices = @transform_1, window_bounds = array<i64: 28, 1, 256>}, {transform_indices = @transform_2, window_bounds = array<i64: 11, 1, 256>}, {transform_indices = @transform_3, window_bounds = array<i64: 30, 1, 256>}, {transform_indices = @transform_4, window_bounds = array<i64: 3, 1, 256>}]} {
    %c0 = arith.constant 0 : index
    %c0_0 = arith.constant 0 : index
    %c0_1 = arith.constant 0 : index
    %0 = vector.load %arg2[%c0, %c0_0, %c0_1] : memref<28x1x256xbf16, #tpu.memory_space<vmem>>, vector<1x1x256xbf16>
    %1 = vector.shape_cast %0 : vector<1x1x256xbf16> to vector<1x256xbf16>
    %2 = arith.extf %1 : vector<1x256xbf16> to vector<1x256xf32>
    %c0_2 = arith.constant 0 : index
    %c0_3 = arith.constant 0 : index
    %c0_4 = arith.constant 0 : index
    %3 = vector.load %arg1[%c0_2, %c0_3, %c0_4] : memref<39x1x256xf32, #tpu.memory_space<vmem>>, vector<1x1x256xf32>
    %4 = vector.shape_cast %3 : vector<1x1x256xf32> to vector<1x256xf32>
    %5 = arith.mulf %2, %4 : vector<1x256xf32>
    %c1 = arith.constant 1 : index
    %c0_5 = arith.constant 0 : index
    %c0_6 = arith.constant 0 : index
    %6 = vector.load %arg2[%c1, %c0_5, %c0_6] : memref<28x1x256xbf16, #tpu.memory_space<vmem>>, vector<1x1x256xbf16>
    %7 = vector.shape_cast %6 : vector<1x1x256xbf16> to vector<1x256xbf16>
    %8 = arith.extf %7 : vector<1x256xbf16> to vector<1x256xf32>
    %c1_7 = arith.constant 1 : index
    %c0_8 = arith.constant 0 : index
    %c0_9 = arith.constant 0 : index
    %9 = vector.load %arg1[%c1_7, %c0_8, %c0_9] : memref<39x1x256xf32, #tpu.memory_space<vmem>>, vector<1x1x256xf32>
    %10 = vector.shape_cast %9 : vector<1x1x256xf32> to vector<1x256xf32>
    %11 = arith.mulf %8, %10 : vector<1x256xf32>
    %12 = arith.addf %5, %11 : vector<1x256xf32>
    %c2 = arith.constant 2 : index
    %c0_10 = arith.constant 0 : index
    %c0_11 = arith.constant 0 : index
    %13 = vector.load %arg2[%c2, %c0_10, %c0_11] : memref<28x1x256xbf16, #tpu.memory_space<vmem>>, vector<1x1x256xbf16>
    %14 = vector.shape_cast %13 : vector<1x1x256xbf16> to vector<1x256xbf16>
    %15 = arith.extf %14 : vector<1x256xbf16> to vector<1x256xf32>
    %c2_12 = arith.constant 2 : index
    %c0_13 = arith.constant 0 : index
    %c0_14 = arith.constant 0 : index
    %16 = vector.load %arg1[%c2_12, %c0_13, %c0_14] : memref<39x1x256xf32, #tpu.memory_space<vmem>>, vector<1x1x256xf32>
    %17 = vector.shape_cast %16 : vector<1x1x256xf32> to vector<1x256xf32>
    %18 = arith.mulf %15, %17 : vector<1x256xf32>
    %19 = arith.addf %12, %18 : vector<1x256xf32>
    %c3 = arith.constant 3 : index
    %c0_15 = arith.constant 0 : index
    %c0_16 = arith.constant 0 : index
    %20 = vector.load %arg2[%c3, %c0_15, %c0_16] : memref<28x1x256xbf16, #tpu.memory_space<vmem>>, vector<1x1x256xbf16>
    %21 = vector.shape_cast %20 : vector<1x1x256xbf16> to vector<1x256xbf16>
    %22 = arith.extf %21 : vector<1x256xbf16> to vector<1x256xf32>
    %c3_17 = arith.constant 3 : index
    %c0_18 = arith.constant 0 : index
    %c0_19 = arith.constant 0 : index
    %23 = vector.load %arg1[%c3_17, %c0_18, %c0_19] : memref<39x1x256xf32, #tpu.memory_space<vmem>>, vector<1x1x256xf32>
    %24 = vector.shape_cast %23 : vector<1x1x256xf32> to vector<1x256xf32>
    %25 = arith.mulf %22, %24 : vector<1x256xf32>
    %26 = arith.addf %19, %25 : vector<1x256xf32>
    %c4 = arith.constant 4 : index
    %c0_20 = arith.constant 0 : index
    %c0_21 = arith.constant 0 : index
    %27 = vector.load %arg2[%c4, %c0_20, %c0_21] : memref<28x1x256xbf16, #tpu.memory_space<vmem>>, vector<1x1x256xbf16>
    %28 = vector.shape_cast %27 : vector<1x1x256xbf16> to vector<1x256xbf16>
    %29 = arith.extf %28 : vector<1x256xbf16> to vector<1x256xf32>
    %c4_22 = arith.constant 4 : index
    %c0_23 = arith.constant 0 : index
    %c0_24 = arith.constant 0 : index
    %30 = vector.load %arg1[%c4_22, %c0_23, %c0_24] : memref<39x1x256xf32, #tpu.memory_space<vmem>>, vector<1x1x256xf32>
    %31 = vector.shape_cast %30 : vector<1x1x256xf32> to vector<1x256xf32>
    %32 = arith.mulf %29, %31 : vector<1x256xf32>
    %33 = arith.addf %26, %32 : vector<1x256xf32>
    %c5 = arith.constant 5 : index
    %c0_25 = arith.constant 0 : index
    %c0_26 = arith.constant 0 : index
    %34 = vector.load %arg2[%c5, %c0_25, %c0_26] : memref<28x1x256xbf16, #tpu.memory_space<vmem>>, vector<1x1x256xbf16>
    %35 = vector.shape_cast %34 : vector<1x1x256xbf16> to vector<1x256xbf16>
    %36 = arith.extf %35 : vector<1x256xbf16> to vector<1x256xf32>
    %c5_27 = arith.constant 5 : index
    %c0_28 = arith.constant 0 : index
    %c0_29 = arith.constant 0 : index
    %37 = vector.load %arg1[%c5_27, %c0_28, %c0_29] : memref<39x1x256xf32, #tpu.memory_space<vmem>>, vector<1x1x256xf32>
    %38 = vector.shape_cast %37 : vector<1x1x256xf32> to vector<1x256xf32>
    %39 = arith.mulf %36, %38 : vector<1x256xf32>
    %40 = arith.addf %33, %39 : vector<1x256xf32>
    %c6 = arith.constant 6 : index
    %c0_30 = arith.constant 0 : index
    %c0_31 = arith.constant 0 : index
    %41 = vector.load %arg2[%c6, %c0_30, %c0_31] : memref<28x1x256xbf16, #tpu.memory_space<vmem>>, vector<1x1x256xbf16>
    %42 = vector.shape_cast %41 : vector<1x1x256xbf16> to vector<1x256xbf16>
    %43 = arith.extf %42 : vector<1x256xbf16> to vector<1x256xf32>
    %c6_32 = arith.constant 6 : index
    %c0_33 = arith.constant 0 : index
    %c0_34 = arith.constant 0 : index
    %44 = vector.load %arg1[%c6_32, %c0_33, %c0_34] : memref<39x1x256xf32, #tpu.memory_space<vmem>>, vector<1x1x256xf32>
    %45 = vector.shape_cast %44 : vector<1x1x256xf32> to vector<1x256xf32>
    %46 = arith.mulf %43, %45 : vector<1x256xf32>
    %47 = arith.addf %40, %46 : vector<1x256xf32>
    %c7 = arith.constant 7 : index
    %c0_35 = arith.constant 0 : index
    %c0_36 = arith.constant 0 : index
    %48 = vector.load %arg2[%c7, %c0_35, %c0_36] : memref<28x1x256xbf16, #tpu.memory_space<vmem>>, vector<1x1x256xbf16>
    %49 = vector.shape_cast %48 : vector<1x1x256xbf16> to vector<1x256xbf16>
    %50 = arith.extf %49 : vector<1x256xbf16> to vector<1x256xf32>
    %c7_37 = arith.constant 7 : index
    %c0_38 = arith.constant 0 : index
    %c0_39 = arith.constant 0 : index
    %51 = vector.load %arg1[%c7_37, %c0_38, %c0_39] : memref<39x1x256xf32, #tpu.memory_space<vmem>>, vector<1x1x256xf32>
    %52 = vector.shape_cast %51 : vector<1x1x256xf32> to vector<1x256xf32>
    %53 = arith.mulf %50, %52 : vector<1x256xf32>
    %54 = arith.addf %47, %53 : vector<1x256xf32>
    %c8 = arith.constant 8 : index
    %c0_40 = arith.constant 0 : index
    %c0_41 = arith.constant 0 : index
    %55 = vector.load %arg2[%c8, %c0_40, %c0_41] : memref<28x1x256xbf16, #tpu.memory_space<vmem>>, vector<1x1x256xbf16>
    %56 = vector.shape_cast %55 : vector<1x1x256xbf16> to vector<1x256xbf16>
    %57 = arith.extf %56 : vector<1x256xbf16> to vector<1x256xf32>
    %c8_42 = arith.constant 8 : index
    %c0_43 = arith.constant 0 : index
    %c0_44 = arith.constant 0 : index
    %58 = vector.load %arg1[%c8_42, %c0_43, %c0_44] : memref<39x1x256xf32, #tpu.memory_space<vmem>>, vector<1x1x256xf32>
    %59 = vector.shape_cast %58 : vector<1x1x256xf32> to vector<1x256xf32>
    %60 = arith.mulf %57, %59 : vector<1x256xf32>
    %61 = arith.addf %54, %60 : vector<1x256xf32>
    %c9 = arith.constant 9 : index
    %c0_45 = arith.constant 0 : index
    %c0_46 = arith.constant 0 : index
    %62 = vector.load %arg2[%c9, %c0_45, %c0_46] : memref<28x1x256xbf16, #tpu.memory_space<vmem>>, vector<1x1x256xbf16>
    %63 = vector.shape_cast %62 : vector<1x1x256xbf16> to vector<1x256xbf16>
    %64 = arith.extf %63 : vector<1x256xbf16> to vector<1x256xf32>
    %c10 = arith.constant 10 : index
    %c0_47 = arith.constant 0 : index
    %c0_48 = arith.constant 0 : index
    %65 = vector.load %arg1[%c10, %c0_47, %c0_48] : memref<39x1x256xf32, #tpu.memory_space<vmem>>, vector<1x1x256xf32>
    %66 = vector.shape_cast %65 : vector<1x1x256xf32> to vector<1x256xf32>
    %67 = arith.mulf %64, %66 : vector<1x256xf32>
    %68 = arith.addf %61, %67 : vector<1x256xf32>
    %c10_49 = arith.constant 10 : index
    %c0_50 = arith.constant 0 : index
    %c0_51 = arith.constant 0 : index
    %69 = vector.load %arg2[%c10_49, %c0_50, %c0_51] : memref<28x1x256xbf16, #tpu.memory_space<vmem>>, vector<1x1x256xbf16>
    %70 = vector.shape_cast %69 : vector<1x1x256xbf16> to vector<1x256xbf16>
    %71 = arith.extf %70 : vector<1x256xbf16> to vector<1x256xf32>
    %c11 = arith.constant 11 : index
    %c0_52 = arith.constant 0 : index
    %c0_53 = arith.constant 0 : index
    %72 = vector.load %arg1[%c11, %c0_52, %c0_53] : memref<39x1x256xf32, #tpu.memory_space<vmem>>, vector<1x1x256xf32>
    %73 = vector.shape_cast %72 : vector<1x1x256xf32> to vector<1x256xf32>
    %74 = arith.mulf %71, %73 : vector<1x256xf32>
    %75 = arith.addf %68, %74 : vector<1x256xf32>
    %c11_54 = arith.constant 11 : index
    %c0_55 = arith.constant 0 : index
    %c0_56 = arith.constant 0 : index
    %76 = vector.load %arg2[%c11_54, %c0_55, %c0_56] : memref<28x1x256xbf16, #tpu.memory_space<vmem>>, vector<1x1x256xbf16>
    %77 = vector.shape_cast %76 : vector<1x1x256xbf16> to vector<1x256xbf16>
    %78 = arith.extf %77 : vector<1x256xbf16> to vector<1x256xf32>
    %c12 = arith.constant 12 : index
    %c0_57 = arith.constant 0 : index
    %c0_58 = arith.constant 0 : index
    %79 = vector.load %arg1[%c12, %c0_57, %c0_58] : memref<39x1x256xf32, #tpu.memory_space<vmem>>, vector<1x1x256xf32>
    %80 = vector.shape_cast %79 : vector<1x1x256xf32> to vector<1x256xf32>
    %81 = arith.mulf %78, %80 : vector<1x256xf32>
    %82 = arith.addf %75, %81 : vector<1x256xf32>
    %c12_59 = arith.constant 12 : index
    %c0_60 = arith.constant 0 : index
    %c0_61 = arith.constant 0 : index
    %83 = vector.load %arg2[%c12_59, %c0_60, %c0_61] : memref<28x1x256xbf16, #tpu.memory_space<vmem>>, vector<1x1x256xbf16>
    %84 = vector.shape_cast %83 : vector<1x1x256xbf16> to vector<1x256xbf16>
    %85 = arith.extf %84 : vector<1x256xbf16> to vector<1x256xf32>
    %c13 = arith.constant 13 : index
    %c0_62 = arith.constant 0 : index
    %c0_63 = arith.constant 0 : index
    %86 = vector.load %arg1[%c13, %c0_62, %c0_63] : memref<39x1x256xf32, #tpu.memory_space<vmem>>, vector<1x1x256xf32>
    %87 = vector.shape_cast %86 : vector<1x1x256xf32> to vector<1x256xf32>
    %88 = arith.mulf %85, %87 : vector<1x256xf32>
    %89 = arith.addf %82, %88 : vector<1x256xf32>
    %c13_64 = arith.constant 13 : index
    %c0_65 = arith.constant 0 : index
    %c0_66 = arith.constant 0 : index
    %90 = vector.load %arg2[%c13_64, %c0_65, %c0_66] : memref<28x1x256xbf16, #tpu.memory_space<vmem>>, vector<1x1x256xbf16>
    %91 = vector.shape_cast %90 : vector<1x1x256xbf16> to vector<1x256xbf16>
    %92 = arith.extf %91 : vector<1x256xbf16> to vector<1x256xf32>
    %c14 = arith.constant 14 : index
    %c0_67 = arith.constant 0 : index
    %c0_68 = arith.constant 0 : index
    %93 = vector.load %arg1[%c14, %c0_67, %c0_68] : memref<39x1x256xf32, #tpu.memory_space<vmem>>, vector<1x1x256xf32>
    %94 = vector.shape_cast %93 : vector<1x1x256xf32> to vector<1x256xf32>
    %95 = arith.mulf %92, %94 : vector<1x256xf32>
    %96 = arith.addf %89, %95 : vector<1x256xf32>
    %c14_69 = arith.constant 14 : index
    %c0_70 = arith.constant 0 : index
    %c0_71 = arith.constant 0 : index
    %97 = vector.load %arg2[%c14_69, %c0_70, %c0_71] : memref<28x1x256xbf16, #tpu.memory_space<vmem>>, vector<1x1x256xbf16>
    %98 = vector.shape_cast %97 : vector<1x1x256xbf16> to vector<1x256xbf16>
    %99 = arith.extf %98 : vector<1x256xbf16> to vector<1x256xf32>
    %c15 = arith.constant 15 : index
    %c0_72 = arith.constant 0 : index
    %c0_73 = arith.constant 0 : index
    %100 = vector.load %arg1[%c15, %c0_72, %c0_73] : memref<39x1x256xf32, #tpu.memory_space<vmem>>, vector<1x1x256xf32>
    %101 = vector.shape_cast %100 : vector<1x1x256xf32> to vector<1x256xf32>
    %102 = arith.mulf %99, %101 : vector<1x256xf32>
    %103 = arith.addf %96, %102 : vector<1x256xf32>
    %c15_74 = arith.constant 15 : index
    %c0_75 = arith.constant 0 : index
    %c0_76 = arith.constant 0 : index
    %104 = vector.load %arg2[%c15_74, %c0_75, %c0_76] : memref<28x1x256xbf16, #tpu.memory_space<vmem>>, vector<1x1x256xbf16>
    %105 = vector.shape_cast %104 : vector<1x1x256xbf16> to vector<1x256xbf16>
    %106 = arith.extf %105 : vector<1x256xbf16> to vector<1x256xf32>
    %c17 = arith.constant 17 : index
    %c0_77 = arith.constant 0 : index
    %c0_78 = arith.constant 0 : index
    %107 = vector.load %arg1[%c17, %c0_77, %c0_78] : memref<39x1x256xf32, #tpu.memory_space<vmem>>, vector<1x1x256xf32>
    %108 = vector.shape_cast %107 : vector<1x1x256xf32> to vector<1x256xf32>
    %109 = arith.mulf %106, %108 : vector<1x256xf32>
    %110 = arith.addf %103, %109 : vector<1x256xf32>
    %c16 = arith.constant 16 : index
    %c0_79 = arith.constant 0 : index
    %c0_80 = arith.constant 0 : index
    %111 = vector.load %arg2[%c16, %c0_79, %c0_80] : memref<28x1x256xbf16, #tpu.memory_space<vmem>>, vector<1x1x256xbf16>
    %112 = vector.shape_cast %111 : vector<1x1x256xbf16> to vector<1x256xbf16>
    %113 = arith.extf %112 : vector<1x256xbf16> to vector<1x256xf32>
    %c18 = arith.constant 18 : index
    %c0_81 = arith.constant 0 : index
    %c0_82 = arith.constant 0 : index
    %114 = vector.load %arg1[%c18, %c0_81, %c0_82] : memref<39x1x256xf32, #tpu.memory_space<vmem>>, vector<1x1x256xf32>
    %115 = vector.shape_cast %114 : vector<1x1x256xf32> to vector<1x256xf32>
    %116 = arith.mulf %113, %115 : vector<1x256xf32>
    %117 = arith.addf %110, %116 : vector<1x256xf32>
    %c17_83 = arith.constant 17 : index
    %c0_84 = arith.constant 0 : index
    %c0_85 = arith.constant 0 : index
    %118 = vector.load %arg2[%c17_83, %c0_84, %c0_85] : memref<28x1x256xbf16, #tpu.memory_space<vmem>>, vector<1x1x256xbf16>
    %119 = vector.shape_cast %118 : vector<1x1x256xbf16> to vector<1x256xbf16>
    %120 = arith.extf %119 : vector<1x256xbf16> to vector<1x256xf32>
    %c19 = arith.constant 19 : index
    %c0_86 = arith.constant 0 : index
    %c0_87 = arith.constant 0 : index
    %121 = vector.load %arg1[%c19, %c0_86, %c0_87] : memref<39x1x256xf32, #tpu.memory_space<vmem>>, vector<1x1x256xf32>
    %122 = vector.shape_cast %121 : vector<1x1x256xf32> to vector<1x256xf32>
    %123 = arith.mulf %120, %122 : vector<1x256xf32>
    %124 = arith.addf %117, %123 : vector<1x256xf32>
    %c18_88 = arith.constant 18 : index
    %c0_89 = arith.constant 0 : index
    %c0_90 = arith.constant 0 : index
    %125 = vector.load %arg2[%c18_88, %c0_89, %c0_90] : memref<28x1x256xbf16, #tpu.memory_space<vmem>>, vector<1x1x256xbf16>
    %126 = vector.shape_cast %125 : vector<1x1x256xbf16> to vector<1x256xbf16>
    %127 = arith.extf %126 : vector<1x256xbf16> to vector<1x256xf32>
    %c20 = arith.constant 20 : index
    %c0_91 = arith.constant 0 : index
    %c0_92 = arith.constant 0 : index
    %128 = vector.load %arg1[%c20, %c0_91, %c0_92] : memref<39x1x256xf32, #tpu.memory_space<vmem>>, vector<1x1x256xf32>
    %129 = vector.shape_cast %128 : vector<1x1x256xf32> to vector<1x256xf32>
    %130 = arith.mulf %127, %129 : vector<1x256xf32>
    %131 = arith.addf %124, %130 : vector<1x256xf32>
    %c19_93 = arith.constant 19 : index
    %c0_94 = arith.constant 0 : index
    %c0_95 = arith.constant 0 : index
    %132 = vector.load %arg2[%c19_93, %c0_94, %c0_95] : memref<28x1x256xbf16, #tpu.memory_space<vmem>>, vector<1x1x256xbf16>
    %133 = vector.shape_cast %132 : vector<1x1x256xbf16> to vector<1x256xbf16>
    %134 = arith.extf %133 : vector<1x256xbf16> to vector<1x256xf32>
    %c22 = arith.constant 22 : index
    %c0_96 = arith.constant 0 : index
    %c0_97 = arith.constant 0 : index
    %135 = vector.load %arg1[%c22, %c0_96, %c0_97] : memref<39x1x256xf32, #tpu.memory_space<vmem>>, vector<1x1x256xf32>
    %136 = vector.shape_cast %135 : vector<1x1x256xf32> to vector<1x256xf32>
    %137 = arith.mulf %134, %136 : vector<1x256xf32>
    %138 = arith.addf %131, %137 : vector<1x256xf32>
    %c20_98 = arith.constant 20 : index
    %c0_99 = arith.constant 0 : index
    %c0_100 = arith.constant 0 : index
    %139 = vector.load %arg2[%c20_98, %c0_99, %c0_100] : memref<28x1x256xbf16, #tpu.memory_space<vmem>>, vector<1x1x256xbf16>
    %140 = vector.shape_cast %139 : vector<1x1x256xbf16> to vector<1x256xbf16>
    %141 = arith.extf %140 : vector<1x256xbf16> to vector<1x256xf32>
    %c23 = arith.constant 23 : index
    %c0_101 = arith.constant 0 : index
    %c0_102 = arith.constant 0 : index
    %142 = vector.load %arg1[%c23, %c0_101, %c0_102] : memref<39x1x256xf32, #tpu.memory_space<vmem>>, vector<1x1x256xf32>
    %143 = vector.shape_cast %142 : vector<1x1x256xf32> to vector<1x256xf32>
    %144 = arith.mulf %141, %143 : vector<1x256xf32>
    %145 = arith.addf %138, %144 : vector<1x256xf32>
    %c21 = arith.constant 21 : index
    %c0_103 = arith.constant 0 : index
    %c0_104 = arith.constant 0 : index
    %146 = vector.load %arg2[%c21, %c0_103, %c0_104] : memref<28x1x256xbf16, #tpu.memory_space<vmem>>, vector<1x1x256xbf16>
    %147 = vector.shape_cast %146 : vector<1x1x256xbf16> to vector<1x256xbf16>
    %148 = arith.extf %147 : vector<1x256xbf16> to vector<1x256xf32>
    %c24 = arith.constant 24 : index
    %c0_105 = arith.constant 0 : index
    %c0_106 = arith.constant 0 : index
    %149 = vector.load %arg1[%c24, %c0_105, %c0_106] : memref<39x1x256xf32, #tpu.memory_space<vmem>>, vector<1x1x256xf32>
    %150 = vector.shape_cast %149 : vector<1x1x256xf32> to vector<1x256xf32>
    %151 = arith.mulf %148, %150 : vector<1x256xf32>
    %152 = arith.addf %145, %151 : vector<1x256xf32>
    %c22_107 = arith.constant 22 : index
    %c0_108 = arith.constant 0 : index
    %c0_109 = arith.constant 0 : index
    %153 = vector.load %arg2[%c22_107, %c0_108, %c0_109] : memref<28x1x256xbf16, #tpu.memory_space<vmem>>, vector<1x1x256xbf16>
    %154 = vector.shape_cast %153 : vector<1x1x256xbf16> to vector<1x256xbf16>
    %155 = arith.extf %154 : vector<1x256xbf16> to vector<1x256xf32>
    %c25 = arith.constant 25 : index
    %c0_110 = arith.constant 0 : index
    %c0_111 = arith.constant 0 : index
    %156 = vector.load %arg1[%c25, %c0_110, %c0_111] : memref<39x1x256xf32, #tpu.memory_space<vmem>>, vector<1x1x256xf32>
    %157 = vector.shape_cast %156 : vector<1x1x256xf32> to vector<1x256xf32>
    %158 = arith.mulf %155, %157 : vector<1x256xf32>
    %159 = arith.addf %152, %158 : vector<1x256xf32>
    %c23_112 = arith.constant 23 : index
    %c0_113 = arith.constant 0 : index
    %c0_114 = arith.constant 0 : index
    %160 = vector.load %arg2[%c23_112, %c0_113, %c0_114] : memref<28x1x256xbf16, #tpu.memory_space<vmem>>, vector<1x1x256xbf16>
    %161 = vector.shape_cast %160 : vector<1x1x256xbf16> to vector<1x256xbf16>
    %162 = arith.extf %161 : vector<1x256xbf16> to vector<1x256xf32>
    %c26 = arith.constant 26 : index
    %c0_115 = arith.constant 0 : index
    %c0_116 = arith.constant 0 : index
    %163 = vector.load %arg1[%c26, %c0_115, %c0_116] : memref<39x1x256xf32, #tpu.memory_space<vmem>>, vector<1x1x256xf32>
    %164 = vector.shape_cast %163 : vector<1x1x256xf32> to vector<1x256xf32>
    %165 = arith.mulf %162, %164 : vector<1x256xf32>
    %166 = arith.addf %159, %165 : vector<1x256xf32>
    %c24_117 = arith.constant 24 : index
    %c0_118 = arith.constant 0 : index
    %c0_119 = arith.constant 0 : index
    %167 = vector.load %arg2[%c24_117, %c0_118, %c0_119] : memref<28x1x256xbf16, #tpu.memory_space<vmem>>, vector<1x1x256xbf16>
    %168 = vector.shape_cast %167 : vector<1x1x256xbf16> to vector<1x256xbf16>
    %169 = arith.extf %168 : vector<1x256xbf16> to vector<1x256xf32>
    %c27 = arith.constant 27 : index
    %c0_120 = arith.constant 0 : index
    %c0_121 = arith.constant 0 : index
    %170 = vector.load %arg1[%c27, %c0_120, %c0_121] : memref<39x1x256xf32, #tpu.memory_space<vmem>>, vector<1x1x256xf32>
    %171 = vector.shape_cast %170 : vector<1x1x256xf32> to vector<1x256xf32>
    %172 = arith.mulf %169, %171 : vector<1x256xf32>
    %173 = arith.addf %166, %172 : vector<1x256xf32>
    %c25_122 = arith.constant 25 : index
    %c0_123 = arith.constant 0 : index
    %c0_124 = arith.constant 0 : index
    %174 = vector.load %arg2[%c25_122, %c0_123, %c0_124] : memref<28x1x256xbf16, #tpu.memory_space<vmem>>, vector<1x1x256xbf16>
    %175 = vector.shape_cast %174 : vector<1x1x256xbf16> to vector<1x256xbf16>
    %176 = arith.extf %175 : vector<1x256xbf16> to vector<1x256xf32>
    %c29 = arith.constant 29 : index
    %c0_125 = arith.constant 0 : index
    %c0_126 = arith.constant 0 : index
    %177 = vector.load %arg1[%c29, %c0_125, %c0_126] : memref<39x1x256xf32, #tpu.memory_space<vmem>>, vector<1x1x256xf32>
    %178 = vector.shape_cast %177 : vector<1x1x256xf32> to vector<1x256xf32>
    %179 = arith.mulf %176, %178 : vector<1x256xf32>
    %180 = arith.addf %173, %179 : vector<1x256xf32>
    %c26_127 = arith.constant 26 : index
    %c0_128 = arith.constant 0 : index
    %c0_129 = arith.constant 0 : index
    %181 = vector.load %arg2[%c26_127, %c0_128, %c0_129] : memref<28x1x256xbf16, #tpu.memory_space<vmem>>, vector<1x1x256xbf16>
    %182 = vector.shape_cast %181 : vector<1x1x256xbf16> to vector<1x256xbf16>
    %183 = arith.extf %182 : vector<1x256xbf16> to vector<1x256xf32>
    %c30 = arith.constant 30 : index
    %c0_130 = arith.constant 0 : index
    %c0_131 = arith.constant 0 : index
    %184 = vector.load %arg1[%c30, %c0_130, %c0_131] : memref<39x1x256xf32, #tpu.memory_space<vmem>>, vector<1x1x256xf32>
    %185 = vector.shape_cast %184 : vector<1x1x256xf32> to vector<1x256xf32>
    %186 = arith.mulf %183, %185 : vector<1x256xf32>
    %187 = arith.addf %180, %186 : vector<1x256xf32>
    %c27_132 = arith.constant 27 : index
    %c0_133 = arith.constant 0 : index
    %c0_134 = arith.constant 0 : index
    %188 = vector.load %arg2[%c27_132, %c0_133, %c0_134] : memref<28x1x256xbf16, #tpu.memory_space<vmem>>, vector<1x1x256xbf16>
    %189 = vector.shape_cast %188 : vector<1x1x256xbf16> to vector<1x256xbf16>
    %190 = arith.extf %189 : vector<1x256xbf16> to vector<1x256xf32>
    %c31 = arith.constant 31 : index
    %c0_135 = arith.constant 0 : index
    %c0_136 = arith.constant 0 : index
    %191 = vector.load %arg1[%c31, %c0_135, %c0_136] : memref<39x1x256xf32, #tpu.memory_space<vmem>>, vector<1x1x256xf32>
    %192 = vector.shape_cast %191 : vector<1x1x256xf32> to vector<1x256xf32>
    %193 = arith.mulf %190, %192 : vector<1x256xf32>
    %194 = arith.addf %187, %193 : vector<1x256xf32>
    %c0_137 = arith.constant 0 : index
    %c0_138 = arith.constant 0 : index
    %c0_139 = arith.constant 0 : index
    %195 = vector.load %arg5[%c0_137, %c0_138, %c0_139] : memref<3x1x256xf32, #tpu.memory_space<vmem>>, vector<1x1x256xf32>
    %196 = vector.shape_cast %195 : vector<1x1x256xf32> to vector<1x256xf32>
    %197 = vector.shape_cast %194 : vector<1x256xf32> to vector<1x1x256xf32>
    tpu.vector_store %arg5[%c0_137, %c0_138, %c0_139], %197 {strides = array<i32>} : memref<3x1x256xf32, #tpu.memory_space<vmem>>, vector<1x1x256xf32>,
    %c0_140 = arith.constant 0 : index
    %c0_141 = arith.constant 0 : index
    %c0_142 = arith.constant 0 : index
    %198 = vector.load %arg3[%c0_140, %c0_141, %c0_142] : memref<11x1x256xbf16, #tpu.memory_space<vmem>>, vector<1x1x256xbf16>
    %199 = vector.shape_cast %198 : vector<1x1x256xbf16> to vector<1x256xbf16>
    %200 = arith.extf %199 : vector<1x256xbf16> to vector<1x256xf32>
    %c7_143 = arith.constant 7 : index
    %c0_144 = arith.constant 0 : index
    %c0_145 = arith.constant 0 : index
    %201 = vector.load %arg1[%c7_143, %c0_144, %c0_145] : memref<39x1x256xf32, #tpu.memory_space<vmem>>, vector<1x1x256xf32>
    %202 = vector.shape_cast %201 : vector<1x1x256xf32> to vector<1x256xf32>
    %203 = arith.mulf %200, %202 : vector<1x256xf32>
    %c1_146 = arith.constant 1 : index
    %c0_147 = arith.constant 0 : index
    %c0_148 = arith.constant 0 : index
    %204 = vector.load %arg3[%c1_146, %c0_147, %c0_148] : memref<11x1x256xbf16, #tpu.memory_space<vmem>>, vector<1x1x256xbf16>
    %205 = vector.shape_cast %204 : vector<1x1x256xbf16> to vector<1x256xbf16>
    %206 = arith.extf %205 : vector<1x256xbf16> to vector<1x256xf32>
    %c8_149 = arith.constant 8 : index
    %c0_150 = arith.constant 0 : index
    %c0_151 = arith.constant 0 : index
    %207 = vector.load %arg1[%c8_149, %c0_150, %c0_151] : memref<39x1x256xf32, #tpu.memory_space<vmem>>, vector<1x1x256xf32>
    %208 = vector.shape_cast %207 : vector<1x1x256xf32> to vector<1x256xf32>
    %209 = arith.mulf %206, %208 : vector<1x256xf32>
    %210 = arith.addf %203, %209 : vector<1x256xf32>
    %c2_152 = arith.constant 2 : index
    %c0_153 = arith.constant 0 : index
    %c0_154 = arith.constant 0 : index
    %211 = vector.load %arg3[%c2_152, %c0_153, %c0_154] : memref<11x1x256xbf16, #tpu.memory_space<vmem>>, vector<1x1x256xbf16>
    %212 = vector.shape_cast %211 : vector<1x1x256xbf16> to vector<1x256xbf16>
    %213 = arith.extf %212 : vector<1x256xbf16> to vector<1x256xf32>
    %c11_155 = arith.constant 11 : index
    %c0_156 = arith.constant 0 : index
    %c0_157 = arith.constant 0 : index
    %214 = vector.load %arg1[%c11_155, %c0_156, %c0_157] : memref<39x1x256xf32, #tpu.memory_space<vmem>>, vector<1x1x256xf32>
    %215 = vector.shape_cast %214 : vector<1x1x256xf32> to vector<1x256xf32>
    %216 = arith.mulf %213, %215 : vector<1x256xf32>
    %217 = arith.addf %210, %216 : vector<1x256xf32>
    %c3_158 = arith.constant 3 : index
    %c0_159 = arith.constant 0 : index
    %c0_160 = arith.constant 0 : index
    %218 = vector.load %arg3[%c3_158, %c0_159, %c0_160] : memref<11x1x256xbf16, #tpu.memory_space<vmem>>, vector<1x1x256xbf16>
    %219 = vector.shape_cast %218 : vector<1x1x256xbf16> to vector<1x256xbf16>
    %220 = arith.extf %219 : vector<1x256xbf16> to vector<1x256xf32>
    %c13_161 = arith.constant 13 : index
    %c0_162 = arith.constant 0 : index
    %c0_163 = arith.constant 0 : index
    %221 = vector.load %arg1[%c13_161, %c0_162, %c0_163] : memref<39x1x256xf32, #tpu.memory_space<vmem>>, vector<1x1x256xf32>
    %222 = vector.shape_cast %221 : vector<1x1x256xf32> to vector<1x256xf32>
    %223 = arith.mulf %220, %222 : vector<1x256xf32>
    %224 = arith.addf %217, %223 : vector<1x256xf32>
    %c4_164 = arith.constant 4 : index
    %c0_165 = arith.constant 0 : index
    %c0_166 = arith.constant 0 : index
    %225 = vector.load %arg3[%c4_164, %c0_165, %c0_166] : memref<11x1x256xbf16, #tpu.memory_space<vmem>>, vector<1x1x256xbf16>
    %226 = vector.shape_cast %225 : vector<1x1x256xbf16> to vector<1x256xbf16>
    %227 = arith.extf %226 : vector<1x256xbf16> to vector<1x256xf32>
    %c18_167 = arith.constant 18 : index
    %c0_168 = arith.constant 0 : index
    %c0_169 = arith.constant 0 : index
    %228 = vector.load %arg1[%c18_167, %c0_168, %c0_169] : memref<39x1x256xf32, #tpu.memory_space<vmem>>, vector<1x1x256xf32>
    %229 = vector.shape_cast %228 : vector<1x1x256xf32> to vector<1x256xf32>
    %230 = arith.mulf %227, %229 : vector<1x256xf32>
    %231 = arith.addf %224, %230 : vector<1x256xf32>
    %c5_170 = arith.constant 5 : index
    %c0_171 = arith.constant 0 : index
    %c0_172 = arith.constant 0 : index
    %232 = vector.load %arg3[%c5_170, %c0_171, %c0_172] : memref<11x1x256xbf16, #tpu.memory_space<vmem>>, vector<1x1x256xbf16>
    %233 = vector.shape_cast %232 : vector<1x1x256xbf16> to vector<1x256xbf16>
    %234 = arith.extf %233 : vector<1x256xbf16> to vector<1x256xf32>
    %c19_173 = arith.constant 19 : index
    %c0_174 = arith.constant 0 : index
    %c0_175 = arith.constant 0 : index
    %235 = vector.load %arg1[%c19_173, %c0_174, %c0_175] : memref<39x1x256xf32, #tpu.memory_space<vmem>>, vector<1x1x256xf32>
    %236 = vector.shape_cast %235 : vector<1x1x256xf32> to vector<1x256xf32>
    %237 = arith.mulf %234, %236 : vector<1x256xf32>
    %238 = arith.addf %231, %237 : vector<1x256xf32>
    %c6_176 = arith.constant 6 : index
    %c0_177 = arith.constant 0 : index
    %c0_178 = arith.constant 0 : index
    %239 = vector.load %arg3[%c6_176, %c0_177, %c0_178] : memref<11x1x256xbf16, #tpu.memory_space<vmem>>, vector<1x1x256xbf16>
    %240 = vector.shape_cast %239 : vector<1x1x256xbf16> to vector<1x256xbf16>
    %241 = arith.extf %240 : vector<1x256xbf16> to vector<1x256xf32>
    %c20_179 = arith.constant 20 : index
    %c0_180 = arith.constant 0 : index
    %c0_181 = arith.constant 0 : index
    %242 = vector.load %arg1[%c20_179, %c0_180, %c0_181] : memref<39x1x256xf32, #tpu.memory_space<vmem>>, vector<1x1x256xf32>
    %243 = vector.shape_cast %242 : vector<1x1x256xf32> to vector<1x256xf32>
    %244 = arith.mulf %241, %243 : vector<1x256xf32>
    %245 = arith.addf %238, %244 : vector<1x256xf32>
    %c7_182 = arith.constant 7 : index
    %c0_183 = arith.constant 0 : index
    %c0_184 = arith.constant 0 : index
    %246 = vector.load %arg3[%c7_182, %c0_183, %c0_184] : memref<11x1x256xbf16, #tpu.memory_space<vmem>>, vector<1x1x256xbf16>
    %247 = vector.shape_cast %246 : vector<1x1x256xbf16> to vector<1x256xbf16>
    %248 = arith.extf %247 : vector<1x256xbf16> to vector<1x256xf32>
    %c23_185 = arith.constant 23 : index
    %c0_186 = arith.constant 0 : index
    %c0_187 = arith.constant 0 : index
    %249 = vector.load %arg1[%c23_185, %c0_186, %c0_187] : memref<39x1x256xf32, #tpu.memory_space<vmem>>, vector<1x1x256xf32>
    %250 = vector.shape_cast %249 : vector<1x1x256xf32> to vector<1x256xf32>
    %251 = arith.mulf %248, %250 : vector<1x256xf32>
    %252 = arith.addf %245, %251 : vector<1x256xf32>
    %c8_188 = arith.constant 8 : index
    %c0_189 = arith.constant 0 : index
    %c0_190 = arith.constant 0 : index
    %253 = vector.load %arg3[%c8_188, %c0_189, %c0_190] : memref<11x1x256xbf16, #tpu.memory_space<vmem>>, vector<1x1x256xbf16>
    %254 = vector.shape_cast %253 : vector<1x1x256xbf16> to vector<1x256xbf16>
    %255 = arith.extf %254 : vector<1x256xbf16> to vector<1x256xf32>
    %c25_191 = arith.constant 25 : index
    %c0_192 = arith.constant 0 : index
    %c0_193 = arith.constant 0 : index
    %256 = vector.load %arg1[%c25_191, %c0_192, %c0_193] : memref<39x1x256xf32, #tpu.memory_space<vmem>>, vector<1x1x256xf32>
    %257 = vector.shape_cast %256 : vector<1x1x256xf32> to vector<1x256xf32>
    %258 = arith.mulf %255, %257 : vector<1x256xf32>
    %259 = arith.addf %252, %258 : vector<1x256xf32>
    %c9_194 = arith.constant 9 : index
    %c0_195 = arith.constant 0 : index
    %c0_196 = arith.constant 0 : index
    %260 = vector.load %arg3[%c9_194, %c0_195, %c0_196] : memref<11x1x256xbf16, #tpu.memory_space<vmem>>, vector<1x1x256xbf16>
    %261 = vector.shape_cast %260 : vector<1x1x256xbf16> to vector<1x256xbf16>
    %262 = arith.extf %261 : vector<1x256xbf16> to vector<1x256xf32>
    %c27_197 = arith.constant 27 : index
    %c0_198 = arith.constant 0 : index
    %c0_199 = arith.constant 0 : index
    %263 = vector.load %arg1[%c27_197, %c0_198, %c0_199] : memref<39x1x256xf32, #tpu.memory_space<vmem>>, vector<1x1x256xf32>
    %264 = vector.shape_cast %263 : vector<1x1x256xf32> to vector<1x256xf32>
    %265 = arith.mulf %262, %264 : vector<1x256xf32>
    %266 = arith.addf %259, %265 : vector<1x256xf32>
    %c10_200 = arith.constant 10 : index
    %c0_201 = arith.constant 0 : index
    %c0_202 = arith.constant 0 : index
    %267 = vector.load %arg3[%c10_200, %c0_201, %c0_202] : memref<11x1x256xbf16, #tpu.memory_space<vmem>>, vector<1x1x256xbf16>
    %268 = vector.shape_cast %267 : vector<1x1x256xbf16> to vector<1x256xbf16>
    %269 = arith.extf %268 : vector<1x256xbf16> to vector<1x256xf32>
    %c31_203 = arith.constant 31 : index
    %c0_204 = arith.constant 0 : index
    %c0_205 = arith.constant 0 : index
    %270 = vector.load %arg1[%c31_203, %c0_204, %c0_205] : memref<39x1x256xf32, #tpu.memory_space<vmem>>, vector<1x1x256xf32>
    %271 = vector.shape_cast %270 : vector<1x1x256xf32> to vector<1x256xf32>
    %272 = arith.mulf %269, %271 : vector<1x256xf32>
    %273 = arith.addf %266, %272 : vector<1x256xf32>
    %c1_206 = arith.constant 1 : index
    %c0_207 = arith.constant 0 : index
    %c0_208 = arith.constant 0 : index
    %274 = vector.load %arg5[%c1_206, %c0_207, %c0_208] : memref<3x1x256xf32, #tpu.memory_space<vmem>>, vector<1x1x256xf32>
    %275 = vector.shape_cast %274 : vector<1x1x256xf32> to vector<1x256xf32>
    %276 = vector.shape_cast %273 : vector<1x256xf32> to vector<1x1x256xf32>
    tpu.vector_store %arg5[%c1_206, %c0_207, %c0_208], %276 {strides = array<i32>} : memref<3x1x256xf32, #tpu.memory_space<vmem>>, vector<1x1x256xf32>,
    %c0_209 = arith.constant 0 : index
    %c0_210 = arith.constant 0 : index
    %c0_211 = arith.constant 0 : index
    %277 = vector.load %arg4[%c0_209, %c0_210, %c0_211] : memref<30x1x256xbf16, #tpu.memory_space<vmem>>, vector<1x1x256xbf16>
    %278 = vector.shape_cast %277 : vector<1x1x256xbf16> to vector<1x256xbf16>
    %279 = arith.extf %278 : vector<1x256xbf16> to vector<1x256xf32>
    %c4_212 = arith.constant 4 : index
    %c0_213 = arith.constant 0 : index
    %c0_214 = arith.constant 0 : index
    %280 = vector.load %arg1[%c4_212, %c0_213, %c0_214] : memref<39x1x256xf32, #tpu.memory_space<vmem>>, vector<1x1x256xf32>
    %281 = vector.shape_cast %280 : vector<1x1x256xf32> to vector<1x256xf32>
    %282 = arith.mulf %279, %281 : vector<1x256xf32>
    %c1_215 = arith.constant 1 : index
    %c0_216 = arith.constant 0 : index
    %c0_217 = arith.constant 0 : index
    %283 = vector.load %arg4[%c1_215, %c0_216, %c0_217] : memref<30x1x256xbf16, #tpu.memory_space<vmem>>, vector<1x1x256xbf16>
    %284 = vector.shape_cast %283 : vector<1x1x256xbf16> to vector<1x256xbf16>
    %285 = arith.extf %284 : vector<1x256xbf16> to vector<1x256xf32>
    %c7_218 = arith.constant 7 : index
    %c0_219 = arith.constant 0 : index
    %c0_220 = arith.constant 0 : index
    %286 = vector.load %arg1[%c7_218, %c0_219, %c0_220] : memref<39x1x256xf32, #tpu.memory_space<vmem>>, vector<1x1x256xf32>
    %287 = vector.shape_cast %286 : vector<1x1x256xf32> to vector<1x256xf32>
    %288 = arith.mulf %285, %287 : vector<1x256xf32>
    %289 = arith.addf %282, %288 : vector<1x256xf32>
    %c2_221 = arith.constant 2 : index
    %c0_222 = arith.constant 0 : index
    %c0_223 = arith.constant 0 : index
    %290 = vector.load %arg4[%c2_221, %c0_222, %c0_223] : memref<30x1x256xbf16, #tpu.memory_space<vmem>>, vector<1x1x256xbf16>
    %291 = vector.shape_cast %290 : vector<1x1x256xbf16> to vector<1x256xbf16>
    %292 = arith.extf %291 : vector<1x256xbf16> to vector<1x256xf32>
    %c8_224 = arith.constant 8 : index
    %c0_225 = arith.constant 0 : index
    %c0_226 = arith.constant 0 : index
    %293 = vector.load %arg1[%c8_224, %c0_225, %c0_226] : memref<39x1x256xf32, #tpu.memory_space<vmem>>, vector<1x1x256xf32>
    %294 = vector.shape_cast %293 : vector<1x1x256xf32> to vector<1x256xf32>
    %295 = arith.mulf %292, %294 : vector<1x256xf32>
    %296 = arith.addf %289, %295 : vector<1x256xf32>
    %c3_227 = arith.constant 3 : index
    %c0_228 = arith.constant 0 : index
    %c0_229 = arith.constant 0 : index
    %297 = vector.load %arg4[%c3_227, %c0_228, %c0_229] : memref<30x1x256xbf16, #tpu.memory_space<vmem>>, vector<1x1x256xbf16>
    %298 = vector.shape_cast %297 : vector<1x1x256xbf16> to vector<1x256xbf16>
    %299 = arith.extf %298 : vector<1x256xbf16> to vector<1x256xf32>
    %c9_230 = arith.constant 9 : index
    %c0_231 = arith.constant 0 : index
    %c0_232 = arith.constant 0 : index
    %300 = vector.load %arg1[%c9_230, %c0_231, %c0_232] : memref<39x1x256xf32, #tpu.memory_space<vmem>>, vector<1x1x256xf32>
    %301 = vector.shape_cast %300 : vector<1x1x256xf32> to vector<1x256xf32>
    %302 = arith.mulf %299, %301 : vector<1x256xf32>
    %303 = arith.addf %296, %302 : vector<1x256xf32>
    %c4_233 = arith.constant 4 : index
    %c0_234 = arith.constant 0 : index
    %c0_235 = arith.constant 0 : index
    %304 = vector.load %arg4[%c4_233, %c0_234, %c0_235] : memref<30x1x256xbf16, #tpu.memory_space<vmem>>, vector<1x1x256xbf16>
    %305 = vector.shape_cast %304 : vector<1x1x256xbf16> to vector<1x256xbf16>
    %306 = arith.extf %305 : vector<1x256xbf16> to vector<1x256xf32>
    %c11_236 = arith.constant 11 : index
    %c0_237 = arith.constant 0 : index
    %c0_238 = arith.constant 0 : index
    %307 = vector.load %arg1[%c11_236, %c0_237, %c0_238] : memref<39x1x256xf32, #tpu.memory_space<vmem>>, vector<1x1x256xf32>
    %308 = vector.shape_cast %307 : vector<1x1x256xf32> to vector<1x256xf32>
    %309 = arith.mulf %306, %308 : vector<1x256xf32>
    %310 = arith.addf %303, %309 : vector<1x256xf32>
    %c5_239 = arith.constant 5 : index
    %c0_240 = arith.constant 0 : index
    %c0_241 = arith.constant 0 : index
    %311 = vector.load %arg4[%c5_239, %c0_240, %c0_241] : memref<30x1x256xbf16, #tpu.memory_space<vmem>>, vector<1x1x256xbf16>
    %312 = vector.shape_cast %311 : vector<1x1x256xbf16> to vector<1x256xbf16>
    %313 = arith.extf %312 : vector<1x256xbf16> to vector<1x256xf32>
    %c12_242 = arith.constant 12 : index
    %c0_243 = arith.constant 0 : index
    %c0_244 = arith.constant 0 : index
    %314 = vector.load %arg1[%c12_242, %c0_243, %c0_244] : memref<39x1x256xf32, #tpu.memory_space<vmem>>, vector<1x1x256xf32>
    %315 = vector.shape_cast %314 : vector<1x1x256xf32> to vector<1x256xf32>
    %316 = arith.mulf %313, %315 : vector<1x256xf32>
    %317 = arith.addf %310, %316 : vector<1x256xf32>
    %c6_245 = arith.constant 6 : index
    %c0_246 = arith.constant 0 : index
    %c0_247 = arith.constant 0 : index
    %318 = vector.load %arg4[%c6_245, %c0_246, %c0_247] : memref<30x1x256xbf16, #tpu.memory_space<vmem>>, vector<1x1x256xbf16>
    %319 = vector.shape_cast %318 : vector<1x1x256xbf16> to vector<1x256xbf16>
    %320 = arith.extf %319 : vector<1x256xbf16> to vector<1x256xf32>
    %c13_248 = arith.constant 13 : index
    %c0_249 = arith.constant 0 : index
    %c0_250 = arith.constant 0 : index
    %321 = vector.load %arg1[%c13_248, %c0_249, %c0_250] : memref<39x1x256xf32, #tpu.memory_space<vmem>>, vector<1x1x256xf32>
    %322 = vector.shape_cast %321 : vector<1x1x256xf32> to vector<1x256xf32>
    %323 = arith.mulf %320, %322 : vector<1x256xf32>
    %324 = arith.addf %317, %323 : vector<1x256xf32>
    %c7_251 = arith.constant 7 : index
    %c0_252 = arith.constant 0 : index
    %c0_253 = arith.constant 0 : index
    %325 = vector.load %arg4[%c7_251, %c0_252, %c0_253] : memref<30x1x256xbf16, #tpu.memory_space<vmem>>, vector<1x1x256xbf16>
    %326 = vector.shape_cast %325 : vector<1x1x256xbf16> to vector<1x256xbf16>
    %327 = arith.extf %326 : vector<1x256xbf16> to vector<1x256xf32>
    %c14_254 = arith.constant 14 : index
    %c0_255 = arith.constant 0 : index
    %c0_256 = arith.constant 0 : index
    %328 = vector.load %arg1[%c14_254, %c0_255, %c0_256] : memref<39x1x256xf32, #tpu.memory_space<vmem>>, vector<1x1x256xf32>
    %329 = vector.shape_cast %328 : vector<1x1x256xf32> to vector<1x256xf32>
    %330 = arith.mulf %327, %329 : vector<1x256xf32>
    %331 = arith.addf %324, %330 : vector<1x256xf32>
    %c8_257 = arith.constant 8 : index
    %c0_258 = arith.constant 0 : index
    %c0_259 = arith.constant 0 : index
    %332 = vector.load %arg4[%c8_257, %c0_258, %c0_259] : memref<30x1x256xbf16, #tpu.memory_space<vmem>>, vector<1x1x256xbf16>
    %333 = vector.shape_cast %332 : vector<1x1x256xbf16> to vector<1x256xbf16>
    %334 = arith.extf %333 : vector<1x256xbf16> to vector<1x256xf32>
    %c15_260 = arith.constant 15 : index
    %c0_261 = arith.constant 0 : index
    %c0_262 = arith.constant 0 : index
    %335 = vector.load %arg1[%c15_260, %c0_261, %c0_262] : memref<39x1x256xf32, #tpu.memory_space<vmem>>, vector<1x1x256xf32>
    %336 = vector.shape_cast %335 : vector<1x1x256xf32> to vector<1x256xf32>
    %337 = arith.mulf %334, %336 : vector<1x256xf32>
    %338 = arith.addf %331, %337 : vector<1x256xf32>
    %c9_263 = arith.constant 9 : index
    %c0_264 = arith.constant 0 : index
    %c0_265 = arith.constant 0 : index
    %339 = vector.load %arg4[%c9_263, %c0_264, %c0_265] : memref<30x1x256xbf16, #tpu.memory_space<vmem>>, vector<1x1x256xbf16>
    %340 = vector.shape_cast %339 : vector<1x1x256xbf16> to vector<1x256xbf16>
    %341 = arith.extf %340 : vector<1x256xbf16> to vector<1x256xf32>
    %c16_266 = arith.constant 16 : index
    %c0_267 = arith.constant 0 : index
    %c0_268 = arith.constant 0 : index
    %342 = vector.load %arg1[%c16_266, %c0_267, %c0_268] : memref<39x1x256xf32, #tpu.memory_space<vmem>>, vector<1x1x256xf32>
    %343 = vector.shape_cast %342 : vector<1x1x256xf32> to vector<1x256xf32>
    %344 = arith.mulf %341, %343 : vector<1x256xf32>
    %345 = arith.addf %338, %344 : vector<1x256xf32>
    %c10_269 = arith.constant 10 : index
    %c0_270 = arith.constant 0 : index
    %c0_271 = arith.constant 0 : index
    %346 = vector.load %arg4[%c10_269, %c0_270, %c0_271] : memref<30x1x256xbf16, #tpu.memory_space<vmem>>, vector<1x1x256xbf16>
    %347 = vector.shape_cast %346 : vector<1x1x256xbf16> to vector<1x256xbf16>
    %348 = arith.extf %347 : vector<1x256xbf16> to vector<1x256xf32>
    %c18_272 = arith.constant 18 : index
    %c0_273 = arith.constant 0 : index
    %c0_274 = arith.constant 0 : index
    %349 = vector.load %arg1[%c18_272, %c0_273, %c0_274] : memref<39x1x256xf32, #tpu.memory_space<vmem>>, vector<1x1x256xf32>
    %350 = vector.shape_cast %349 : vector<1x1x256xf32> to vector<1x256xf32>
    %351 = arith.mulf %348, %350 : vector<1x256xf32>
    %352 = arith.addf %345, %351 : vector<1x256xf32>
    %c11_275 = arith.constant 11 : index
    %c0_276 = arith.constant 0 : index
    %c0_277 = arith.constant 0 : index
    %353 = vector.load %arg4[%c11_275, %c0_276, %c0_277] : memref<30x1x256xbf16, #tpu.memory_space<vmem>>, vector<1x1x256xbf16>
    %354 = vector.shape_cast %353 : vector<1x1x256xbf16> to vector<1x256xbf16>
    %355 = arith.extf %354 : vector<1x256xbf16> to vector<1x256xf32>
    %c19_278 = arith.constant 19 : index
    %c0_279 = arith.constant 0 : index
    %c0_280 = arith.constant 0 : index
    %356 = vector.load %arg1[%c19_278, %c0_279, %c0_280] : memref<39x1x256xf32, #tpu.memory_space<vmem>>, vector<1x1x256xf32>
    %357 = vector.shape_cast %356 : vector<1x1x256xf32> to vector<1x256xf32>
    %358 = arith.mulf %355, %357 : vector<1x256xf32>
    %359 = arith.addf %352, %358 : vector<1x256xf32>
    %c12_281 = arith.constant 12 : index
    %c0_282 = arith.constant 0 : index
    %c0_283 = arith.constant 0 : index
    %360 = vector.load %arg4[%c12_281, %c0_282, %c0_283] : memref<30x1x256xbf16, #tpu.memory_space<vmem>>, vector<1x1x256xbf16>
    %361 = vector.shape_cast %360 : vector<1x1x256xbf16> to vector<1x256xbf16>
    %362 = arith.extf %361 : vector<1x256xbf16> to vector<1x256xf32>
    %c20_284 = arith.constant 20 : index
    %c0_285 = arith.constant 0 : index
    %c0_286 = arith.constant 0 : index
    %363 = vector.load %arg1[%c20_284, %c0_285, %c0_286] : memref<39x1x256xf32, #tpu.memory_space<vmem>>, vector<1x1x256xf32>
    %364 = vector.shape_cast %363 : vector<1x1x256xf32> to vector<1x256xf32>
    %365 = arith.mulf %362, %364 : vector<1x256xf32>
    %366 = arith.addf %359, %365 : vector<1x256xf32>
    %c13_287 = arith.constant 13 : index
    %c0_288 = arith.constant 0 : index
    %c0_289 = arith.constant 0 : index
    %367 = vector.load %arg4[%c13_287, %c0_288, %c0_289] : memref<30x1x256xbf16, #tpu.memory_space<vmem>>, vector<1x1x256xbf16>
    %368 = vector.shape_cast %367 : vector<1x1x256xbf16> to vector<1x256xbf16>
    %369 = arith.extf %368 : vector<1x256xbf16> to vector<1x256xf32>
    %c21_290 = arith.constant 21 : index
    %c0_291 = arith.constant 0 : index
    %c0_292 = arith.constant 0 : index
    %370 = vector.load %arg1[%c21_290, %c0_291, %c0_292] : memref<39x1x256xf32, #tpu.memory_space<vmem>>, vector<1x1x256xf32>
    %371 = vector.shape_cast %370 : vector<1x1x256xf32> to vector<1x256xf32>
    %372 = arith.mulf %369, %371 : vector<1x256xf32>
    %373 = arith.addf %366, %372 : vector<1x256xf32>
    %c14_293 = arith.constant 14 : index
    %c0_294 = arith.constant 0 : index
    %c0_295 = arith.constant 0 : index
    %374 = vector.load %arg4[%c14_293, %c0_294, %c0_295] : memref<30x1x256xbf16, #tpu.memory_space<vmem>>, vector<1x1x256xbf16>
    %375 = vector.shape_cast %374 : vector<1x1x256xbf16> to vector<1x256xbf16>
    %376 = arith.extf %375 : vector<1x256xbf16> to vector<1x256xf32>
    %c22_296 = arith.constant 22 : index
    %c0_297 = arith.constant 0 : index
    %c0_298 = arith.constant 0 : index
    %377 = vector.load %arg1[%c22_296, %c0_297, %c0_298] : memref<39x1x256xf32, #tpu.memory_space<vmem>>, vector<1x1x256xf32>
    %378 = vector.shape_cast %377 : vector<1x1x256xf32> to vector<1x256xf32>
    %379 = arith.mulf %376, %378 : vector<1x256xf32>
    %380 = arith.addf %373, %379 : vector<1x256xf32>
    %c15_299 = arith.constant 15 : index
    %c0_300 = arith.constant 0 : index
    %c0_301 = arith.constant 0 : index
    %381 = vector.load %arg4[%c15_299, %c0_300, %c0_301] : memref<30x1x256xbf16, #tpu.memory_space<vmem>>, vector<1x1x256xbf16>
    %382 = vector.shape_cast %381 : vector<1x1x256xbf16> to vector<1x256xbf16>
    %383 = arith.extf %382 : vector<1x256xbf16> to vector<1x256xf32>
    %c23_302 = arith.constant 23 : index
    %c0_303 = arith.constant 0 : index
    %c0_304 = arith.constant 0 : index
    %384 = vector.load %arg1[%c23_302, %c0_303, %c0_304] : memref<39x1x256xf32, #tpu.memory_space<vmem>>, vector<1x1x256xf32>
    %385 = vector.shape_cast %384 : vector<1x1x256xf32> to vector<1x256xf32>
    %386 = arith.mulf %383, %385 : vector<1x256xf32>
    %387 = arith.addf %380, %386 : vector<1x256xf32>
    %c16_305 = arith.constant 16 : index
    %c0_306 = arith.constant 0 : index
    %c0_307 = arith.constant 0 : index
    %388 = vector.load %arg4[%c16_305, %c0_306, %c0_307] : memref<30x1x256xbf16, #tpu.memory_space<vmem>>, vector<1x1x256xbf16>
    %389 = vector.shape_cast %388 : vector<1x1x256xbf16> to vector<1x256xbf16>
    %390 = arith.extf %389 : vector<1x256xbf16> to vector<1x256xf32>
    %c24_308 = arith.constant 24 : index
    %c0_309 = arith.constant 0 : index
    %c0_310 = arith.constant 0 : index
    %391 = vector.load %arg1[%c24_308, %c0_309, %c0_310] : memref<39x1x256xf32, #tpu.memory_space<vmem>>, vector<1x1x256xf32>
    %392 = vector.shape_cast %391 : vector<1x1x256xf32> to vector<1x256xf32>
    %393 = arith.mulf %390, %392 : vector<1x256xf32>
    %394 = arith.addf %387, %393 : vector<1x256xf32>
    %c17_311 = arith.constant 17 : index
    %c0_312 = arith.constant 0 : index
    %c0_313 = arith.constant 0 : index
    %395 = vector.load %arg4[%c17_311, %c0_312, %c0_313] : memref<30x1x256xbf16, #tpu.memory_space<vmem>>, vector<1x1x256xbf16>
    %396 = vector.shape_cast %395 : vector<1x1x256xbf16> to vector<1x256xbf16>
    %397 = arith.extf %396 : vector<1x256xbf16> to vector<1x256xf32>
    %c25_314 = arith.constant 25 : index
    %c0_315 = arith.constant 0 : index
    %c0_316 = arith.constant 0 : index
    %398 = vector.load %arg1[%c25_314, %c0_315, %c0_316] : memref<39x1x256xf32, #tpu.memory_space<vmem>>, vector<1x1x256xf32>
    %399 = vector.shape_cast %398 : vector<1x1x256xf32> to vector<1x256xf32>
    %400 = arith.mulf %397, %399 : vector<1x256xf32>
    %401 = arith.addf %394, %400 : vector<1x256xf32>
    %c18_317 = arith.constant 18 : index
    %c0_318 = arith.constant 0 : index
    %c0_319 = arith.constant 0 : index
    %402 = vector.load %arg4[%c18_317, %c0_318, %c0_319] : memref<30x1x256xbf16, #tpu.memory_space<vmem>>, vector<1x1x256xbf16>
    %403 = vector.shape_cast %402 : vector<1x1x256xbf16> to vector<1x256xbf16>
    %404 = arith.extf %403 : vector<1x256xbf16> to vector<1x256xf32>
    %c26_320 = arith.constant 26 : index
    %c0_321 = arith.constant 0 : index
    %c0_322 = arith.constant 0 : index
    %405 = vector.load %arg1[%c26_320, %c0_321, %c0_322] : memref<39x1x256xf32, #tpu.memory_space<vmem>>, vector<1x1x256xf32>
    %406 = vector.shape_cast %405 : vector<1x1x256xf32> to vector<1x256xf32>
    %407 = arith.mulf %404, %406 : vector<1x256xf32>
    %408 = arith.addf %401, %407 : vector<1x256xf32>
    %c19_323 = arith.constant 19 : index
    %c0_324 = arith.constant 0 : index
    %c0_325 = arith.constant 0 : index
    %409 = vector.load %arg4[%c19_323, %c0_324, %c0_325] : memref<30x1x256xbf16, #tpu.memory_space<vmem>>, vector<1x1x256xbf16>
    %410 = vector.shape_cast %409 : vector<1x1x256xbf16> to vector<1x256xbf16>
    %411 = arith.extf %410 : vector<1x256xbf16> to vector<1x256xf32>
    %c27_326 = arith.constant 27 : index
    %c0_327 = arith.constant 0 : index
    %c0_328 = arith.constant 0 : index
    %412 = vector.load %arg1[%c27_326, %c0_327, %c0_328] : memref<39x1x256xf32, #tpu.memory_space<vmem>>, vector<1x1x256xf32>
    %413 = vector.shape_cast %412 : vector<1x1x256xf32> to vector<1x256xf32>
    %414 = arith.mulf %411, %413 : vector<1x256xf32>
    %415 = arith.addf %408, %414 : vector<1x256xf32>
    %c20_329 = arith.constant 20 : index
    %c0_330 = arith.constant 0 : index
    %c0_331 = arith.constant 0 : index
    %416 = vector.load %arg4[%c20_329, %c0_330, %c0_331] : memref<30x1x256xbf16, #tpu.memory_space<vmem>>, vector<1x1x256xbf16>
    %417 = vector.shape_cast %416 : vector<1x1x256xbf16> to vector<1x256xbf16>
    %418 = arith.extf %417 : vector<1x256xbf16> to vector<1x256xf32>
    %c28 = arith.constant 28 : index
    %c0_332 = arith.constant 0 : index
    %c0_333 = arith.constant 0 : index
    %419 = vector.load %arg1[%c28, %c0_332, %c0_333] : memref<39x1x256xf32, #tpu.memory_space<vmem>>, vector<1x1x256xf32>
    %420 = vector.shape_cast %419 : vector<1x1x256xf32> to vector<1x256xf32>
    %421 = arith.mulf %418, %420 : vector<1x256xf32>
    %422 = arith.addf %415, %421 : vector<1x256xf32>
    %c21_334 = arith.constant 21 : index
    %c0_335 = arith.constant 0 : index
    %c0_336 = arith.constant 0 : index
    %423 = vector.load %arg4[%c21_334, %c0_335, %c0_336] : memref<30x1x256xbf16, #tpu.memory_space<vmem>>, vector<1x1x256xbf16>
    %424 = vector.shape_cast %423 : vector<1x1x256xbf16> to vector<1x256xbf16>
    %425 = arith.extf %424 : vector<1x256xbf16> to vector<1x256xf32>
    %c30_337 = arith.constant 30 : index
    %c0_338 = arith.constant 0 : index
    %c0_339 = arith.constant 0 : index
    %426 = vector.load %arg1[%c30_337, %c0_338, %c0_339] : memref<39x1x256xf32, #tpu.memory_space<vmem>>, vector<1x1x256xf32>
    %427 = vector.shape_cast %426 : vector<1x1x256xf32> to vector<1x256xf32>
    %428 = arith.mulf %425, %427 : vector<1x256xf32>
    %429 = arith.addf %422, %428 : vector<1x256xf32>
    %c22_340 = arith.constant 22 : index
    %c0_341 = arith.constant 0 : index
    %c0_342 = arith.constant 0 : index
    %430 = vector.load %arg4[%c22_340, %c0_341, %c0_342] : memref<30x1x256xbf16, #tpu.memory_space<vmem>>, vector<1x1x256xbf16>
    %431 = vector.shape_cast %430 : vector<1x1x256xbf16> to vector<1x256xbf16>
    %432 = arith.extf %431 : vector<1x256xbf16> to vector<1x256xf32>
    %c31_343 = arith.constant 31 : index
    %c0_344 = arith.constant 0 : index
    %c0_345 = arith.constant 0 : index
    %433 = vector.load %arg1[%c31_343, %c0_344, %c0_345] : memref<39x1x256xf32, #tpu.memory_space<vmem>>, vector<1x1x256xf32>
    %434 = vector.shape_cast %433 : vector<1x1x256xf32> to vector<1x256xf32>
    %435 = arith.mulf %432, %434 : vector<1x256xf32>
    %436 = arith.addf %429, %435 : vector<1x256xf32>
    %c23_346 = arith.constant 23 : index
    %c0_347 = arith.constant 0 : index
    %c0_348 = arith.constant 0 : index
    %437 = vector.load %arg4[%c23_346, %c0_347, %c0_348] : memref<30x1x256xbf16, #tpu.memory_space<vmem>>, vector<1x1x256xbf16>
    %438 = vector.shape_cast %437 : vector<1x1x256xbf16> to vector<1x256xbf16>
    %439 = arith.extf %438 : vector<1x256xbf16> to vector<1x256xf32>
    %c32 = arith.constant 32 : index
    %c0_349 = arith.constant 0 : index
    %c0_350 = arith.constant 0 : index
    %440 = vector.load %arg1[%c32, %c0_349, %c0_350] : memref<39x1x256xf32, #tpu.memory_space<vmem>>, vector<1x1x256xf32>
    %441 = vector.shape_cast %440 : vector<1x1x256xf32> to vector<1x256xf32>
    %442 = arith.mulf %439, %441 : vector<1x256xf32>
    %443 = arith.addf %436, %442 : vector<1x256xf32>
    %c24_351 = arith.constant 24 : index
    %c0_352 = arith.constant 0 : index
    %c0_353 = arith.constant 0 : index
    %444 = vector.load %arg4[%c24_351, %c0_352, %c0_353] : memref<30x1x256xbf16, #tpu.memory_space<vmem>>, vector<1x1x256xbf16>
    %445 = vector.shape_cast %444 : vector<1x1x256xbf16> to vector<1x256xbf16>
    %446 = arith.extf %445 : vector<1x256xbf16> to vector<1x256xf32>
    %c33 = arith.constant 33 : index
    %c0_354 = arith.constant 0 : index
    %c0_355 = arith.constant 0 : index
    %447 = vector.load %arg1[%c33, %c0_354, %c0_355] : memref<39x1x256xf32, #tpu.memory_space<vmem>>, vector<1x1x256xf32>
    %448 = vector.shape_cast %447 : vector<1x1x256xf32> to vector<1x256xf32>
    %449 = arith.mulf %446, %448 : vector<1x256xf32>
    %450 = arith.addf %443, %449 : vector<1x256xf32>
    %c25_356 = arith.constant 25 : index
    %c0_357 = arith.constant 0 : index
    %c0_358 = arith.constant 0 : index
    %451 = vector.load %arg4[%c25_356, %c0_357, %c0_358] : memref<30x1x256xbf16, #tpu.memory_space<vmem>>, vector<1x1x256xbf16>
    %452 = vector.shape_cast %451 : vector<1x1x256xbf16> to vector<1x256xbf16>
    %453 = arith.extf %452 : vector<1x256xbf16> to vector<1x256xf32>
    %c34 = arith.constant 34 : index
    %c0_359 = arith.constant 0 : index
    %c0_360 = arith.constant 0 : index
    %454 = vector.load %arg1[%c34, %c0_359, %c0_360] : memref<39x1x256xf32, #tpu.memory_space<vmem>>, vector<1x1x256xf32>
    %455 = vector.shape_cast %454 : vector<1x1x256xf32> to vector<1x256xf32>
    %456 = arith.mulf %453, %455 : vector<1x256xf32>
    %457 = arith.addf %450, %456 : vector<1x256xf32>
    %c26_361 = arith.constant 26 : index
    %c0_362 = arith.constant 0 : index
    %c0_363 = arith.constant 0 : index
    %458 = vector.load %arg4[%c26_361, %c0_362, %c0_363] : memref<30x1x256xbf16, #tpu.memory_space<vmem>>, vector<1x1x256xbf16>
    %459 = vector.shape_cast %458 : vector<1x1x256xbf16> to vector<1x256xbf16>
    %460 = arith.extf %459 : vector<1x256xbf16> to vector<1x256xf32>
    %c35 = arith.constant 35 : index
    %c0_364 = arith.constant 0 : index
    %c0_365 = arith.constant 0 : index
    %461 = vector.load %arg1[%c35, %c0_364, %c0_365] : memref<39x1x256xf32, #tpu.memory_space<vmem>>, vector<1x1x256xf32>
    %462 = vector.shape_cast %461 : vector<1x1x256xf32> to vector<1x256xf32>
    %463 = arith.mulf %460, %462 : vector<1x256xf32>
    %464 = arith.addf %457, %463 : vector<1x256xf32>
    %c27_366 = arith.constant 27 : index
    %c0_367 = arith.constant 0 : index
    %c0_368 = arith.constant 0 : index
    %465 = vector.load %arg4[%c27_366, %c0_367, %c0_368] : memref<30x1x256xbf16, #tpu.memory_space<vmem>>, vector<1x1x256xbf16>
    %466 = vector.shape_cast %465 : vector<1x1x256xbf16> to vector<1x256xbf16>
    %467 = arith.extf %466 : vector<1x256xbf16> to vector<1x256xf32>
    %c36 = arith.constant 36 : index
    %c0_369 = arith.constant 0 : index
    %c0_370 = arith.constant 0 : index
    %468 = vector.load %arg1[%c36, %c0_369, %c0_370] : memref<39x1x256xf32, #tpu.memory_space<vmem>>, vector<1x1x256xf32>
    %469 = vector.shape_cast %468 : vector<1x1x256xf32> to vector<1x256xf32>
    %470 = arith.mulf %467, %469 : vector<1x256xf32>
    %471 = arith.addf %464, %470 : vector<1x256xf32>
    %c28_371 = arith.constant 28 : index
    %c0_372 = arith.constant 0 : index
    %c0_373 = arith.constant 0 : index
    %472 = vector.load %arg4[%c28_371, %c0_372, %c0_373] : memref<30x1x256xbf16, #tpu.memory_space<vmem>>, vector<1x1x256xbf16>
    %473 = vector.shape_cast %472 : vector<1x1x256xbf16> to vector<1x256xbf16>
    %474 = arith.extf %473 : vector<1x256xbf16> to vector<1x256xf32>
    %c37 = arith.constant 37 : index
    %c0_374 = arith.constant 0 : index
    %c0_375 = arith.constant 0 : index
    %475 = vector.load %arg1[%c37, %c0_374, %c0_375] : memref<39x1x256xf32, #tpu.memory_space<vmem>>, vector<1x1x256xf32>
    %476 = vector.shape_cast %475 : vector<1x1x256xf32> to vector<1x256xf32>
    %477 = arith.mulf %474, %476 : vector<1x256xf32>
    %478 = arith.addf %471, %477 : vector<1x256xf32>
    %c29_376 = arith.constant 29 : index
    %c0_377 = arith.constant 0 : index
    %c0_378 = arith.constant 0 : index
    %479 = vector.load %arg4[%c29_376, %c0_377, %c0_378] : memref<30x1x256xbf16, #tpu.memory_space<vmem>>, vector<1x1x256xbf16>
    %480 = vector.shape_cast %479 : vector<1x1x256xbf16> to vector<1x256xbf16>
    %481 = arith.extf %480 : vector<1x256xbf16> to vector<1x256xf32>
    %c38 = arith.constant 38 : index
    %c0_379 = arith.constant 0 : index
    %c0_380 = arith.constant 0 : index
    %482 = vector.load %arg1[%c38, %c0_379, %c0_380] : memref<39x1x256xf32, #tpu.memory_space<vmem>>, vector<1x1x256xf32>
    %483 = vector.shape_cast %482 : vector<1x1x256xf32> to vector<1x256xf32>
    %484 = arith.mulf %481, %483 : vector<1x256xf32>
    %485 = arith.addf %478, %484 : vector<1x256xf32>
    %c2_381 = arith.constant 2 : index
    %c0_382 = arith.constant 0 : index
    %c0_383 = arith.constant 0 : index
    %486 = vector.load %arg5[%c2_381, %c0_382, %c0_383] : memref<3x1x256xf32, #tpu.memory_space<vmem>>, vector<1x1x256xf32>
    %487 = vector.shape_cast %486 : vector<1x1x256xf32> to vector<1x256xf32>
    %488 = vector.shape_cast %485 : vector<1x256xf32> to vector<1x1x256xf32>
    tpu.vector_store %arg5[%c2_381, %c0_382, %c0_383], %488 {strides = array<i32>} : memref<3x1x256xf32, #tpu.memory_space<vmem>>, vector<1x1x256xf32>,
    return
  }
  func.func @transform_0(%arg0: i32) -> (i32, i32, i32) {
    %c0_i32 = arith.constant 0 : i32
    %c0_i32_0 = arith.constant 0 : i32
    %c0_i32_1 = arith.constant 0 : i32
    return %c0_i32, %arg0, %c0_i32_0 : i32, i32, i32
  }
  func.func @transform_1(%arg0: i32) -> (i32, i32, i32) {
    %c0_i32 = arith.constant 0 : i32
    %c0_i32_0 = arith.constant 0 : i32
    %c0_i32_1 = arith.constant 0 : i32
    return %c0_i32, %arg0, %c0_i32_0 : i32, i32, i32
  }
  func.func @transform_2(%arg0: i32) -> (i32, i32, i32) {
    %c0_i32 = arith.constant 0 : i32
    %c0_i32_0 = arith.constant 0 : i32
    %c0_i32_1 = arith.constant 0 : i32
    return %c0_i32, %arg0, %c0_i32_0 : i32, i32, i32
  }
  func.func @transform_3(%arg0: i32) -> (i32, i32, i32) {
    %c0_i32 = arith.constant 0 : i32
    %c0_i32_0 = arith.constant 0 : i32
    %c0_i32_1 = arith.constant 0 : i32
    return %c0_i32, %arg0, %c0_i32_0 : i32, i32, i32
  }
  func.func @transform_4(%arg0: i32) -> (i32, i32, i32) {
    %c0_i32 = arith.constant 0 : i32
    %c0_i32_0 = arith.constant 0 : i32
    %c0_i32_1 = arith.constant 0 : i32
    return %c0_i32, %arg0, %c0_i32_0 : i32, i32, i32
  }
}

</mosaic_0001>

<llo_original>
// kernel: forward.1
$region0: #{forward.1}
  #allocation0 [shape = 'u32[]', space=smem, size = 0x4, offset = 0x4, fixed_abs, tag = 'smem constant byte address 0x4 - core index']
  #allocation1 [shape = 'u32[144,128]{1,0:T(1,128)}', space=vmem, size = 0x12000, scoped, tag = 'internal scratch']
  %s0 = inlined_call_operand.vmem [shape: f32[39,1,256], index: 0, kind: input, shape index: {}]
  %s1 = inlined_call_operand.vmem [shape: bf16[28,1,256], index: 1, kind: input, shape index: {}]
  %s2 = inlined_call_operand.vmem [shape: bf16[11,1,256], index: 2, kind: input, shape index: {}]
  %s3 = inlined_call_operand.vmem [shape: bf16[30,1,256], index: 3, kind: input, shape index: {}]
  %s4 = inlined_call_operand.vmem [shape: f32[3,1,256], index: 4, kind: output, shape index: {}]
  %s5 = sld [smem:[#allocation0]]
  $region26: #{forward.1} parent=0
    _
  %s7 = ssub.s32 1, %s5
  %s8 = scalar_select 0, %s7, %s5
  // Predicated region
  $region2: #{forward.1} parent=0 // pred_check
    _
  $region3: #{forward.1} parent=0 // pred_check_branch
    %10 = sbr.rel (0) target = $region5
  $region4: #{forward.1} parent=0 // pred_region
    _
  $region5: #{forward.1} parent=0 // pred_fallthru
    _
  // Predicated region
  $region6: #{forward.1} parent=0 // pred_check
    _
  $region7: #{forward.1} parent=0 // pred_check_branch
    %12 = sbr.rel (0) target = $region9
  $region8: #{forward.1} parent=0 // pred_region
    _
  $region9: #{forward.1} parent=0 // pred_fallthru
    _
  // Predicated region
  $region10: #{forward.1} parent=0 // pred_check
    _
  $region11: #{forward.1} parent=0 // pred_check_branch
    %14 = sbr.rel (0) target = $region13
  $region12: #{forward.1} parent=0 // pred_region
    _
  $region13: #{forward.1} parent=0 // pred_fallthru
    _
  // Predicated region
  $region14: #{forward.1} parent=0 // pred_check
    _
  $region15: #{forward.1} parent=0 // pred_check_branch
    %16 = sbr.rel (0) target = $region17
  $region16: #{forward.1} parent=0 // pred_region
    _
  $region17: #{forward.1} parent=0 // pred_fallthru
    _
  %v17 = vld [vmem:[%s1] sm:$0x3]
  %v18 = vunpack.c.l.bf16 %v17
  %v19 = vld [vmem:[%s0] sm:$0x3]
  %v22 = vunpack.c.l.s4 857870592
  %v23 = vunpack.c.0.s8 %v22
  %v24 = vlaneseq
  %v25 = vshrl.u32 %v24, 7
  %v26 = vsub.s32 %v23, %v25
  %v27 = vrot.slane %v19, %v26
  %v29 = vmul.f32 %v18, %v27
  %s30 = scalar_lea.vmem %s1, 2
  %v31 = vld [vmem:[%s30] sm:$0x3]
  %v32 = vunpack.c.l.bf16 %v31
  %s33 = scalar_lea.vmem %s0, 2
  %v34 = vld [vmem:[%s33] sm:$0x3]
  %v37 = vunpack.c.l.s4 857870592
  %v38 = vunpack.c.0.s8 %v37
  %v39 = vlaneseq
  %v40 = vshrl.u32 %v39, 7
  %v41 = vsub.s32 %v38, %v40
  %v42 = vrot.slane %v34, %v41
  %v44 = vmul.f32 %v32, %v42
  %v45 = vadd.f32 %v29, %v44
  %s46 = scalar_lea.vmem %s1, 4
  %v47 = vld [vmem:[%s46] sm:$0x3]
  %v48 = vunpack.c.l.bf16 %v47
  %s49 = scalar_lea.vmem %s0, 4
  %v50 = vld [vmem:[%s49] sm:$0x3]
  %v53 = vunpack.c.l.s4 857870592
  %v54 = vunpack.c.0.s8 %v53
  %v55 = vlaneseq
  %v56 = vshrl.u32 %v55, 7
  %v57 = vsub.s32 %v54, %v56
  %v58 = vrot.slane %v50, %v57
  %v60 = vmul.f32 %v48, %v58
  %v61 = vadd.f32 %v45, %v60
  %s62 = scalar_lea.vmem %s1, 6
  %v63 = vld [vmem:[%s62] sm:$0x3]
  %v64 = vunpack.c.l.bf16 %v63
  %s65 = scalar_lea.vmem %s0, 6
  %v66 = vld [vmem:[%s65] sm:$0x3]
  %v69 = vunpack.c.l.s4 857870592
  %v70 = vunpack.c.0.s8 %v69
  %v71 = vlaneseq
  %v72 = vshrl.u32 %v71, 7
  %v73 = vsub.s32 %v70, %v72
  %v74 = vrot.slane %v66, %v73
  %v76 = vmul.f32 %v64, %v74
  %v77 = vadd.f32 %v61, %v76
  %s78 = scalar_lea.vmem %s1, 8
  %v79 = vld [vmem:[%s78] sm:$0x3]
  %v80 = vunpack.c.l.bf16 %v79
  %s81 = scalar_lea.vmem %s0, 8
  %v82 = vld [vmem:[%s81] sm:$0x3]
  %v85 = vunpack.c.l.s4 857870592
  %v86 = vunpack.c.0.s8 %v85
  %v87 = vlaneseq
  %v88 = vshrl.u32 %v87, 7
  %v89 = vsub.s32 %v86, %v88
  %v90 = vrot.slane %v82, %v89
  %v92 = vmul.f32 %v80, %v90
  %v93 = vadd.f32 %v77, %v92
  %s94 = scalar_lea.vmem %s1, 10
  %v95 = vld [vmem:[%s94] sm:$0x3]
  %v96 = vunpack.c.l.bf16 %v95
  %s97 = scalar_lea.vmem %s0, 10
  %v98 = vld [vmem:[%s97] sm:$0x3]
  %v101 = vunpack.c.l.s4 857870592
  %v102 = vunpack.c.0.s8 %v101
  %v103 = vlaneseq
  %v104 = vshrl.u32 %v103, 7
  %v105 = vsub.s32 %v102, %v104
  %v106 = vrot.slane %v98, %v105
  %v108 = vmul.f32 %v96, %v106
  %v109 = vadd.f32 %v93, %v108
  %s110 = scalar_lea.vmem %s1, 12
  %v111 = vld [vmem:[%s110] sm:$0x3]
  %v112 = vunpack.c.l.bf16 %v111
  %s113 = scalar_lea.vmem %s0, 12
  %v114 = vld [vmem:[%s113] sm:$0x3]
  %v117 = vunpack.c.l.s4 857870592
  %v118 = vunpack.c.0.s8 %v117
  %v119 = vlaneseq
  %v120 = vshrl.u32 %v119, 7
  %v121 = vsub.s32 %v118, %v120
  %v122 = vrot.slane %v114, %v121
  %v124 = vmul.f32 %v112, %v122
  %v125 = vadd.f32 %v109, %v124
  %s126 = scalar_lea.vmem %s1, 14
  %v127 = vld [vmem:[%s126] sm:$0x3]
  %v128 = vunpack.c.l.bf16 %v127
  %s129 = scalar_lea.vmem %s0, 14
  %v130 = vld [vmem:[%s129] sm:$0x3]
  %v133 = vunpack.c.l.s4 857870592
  %v134 = vunpack.c.0.s8 %v133
  %v135 = vlaneseq
  %v136 = vshrl.u32 %v135, 7
  %v137 = vsub.s32 %v134, %v136
  %v138 = vrot.slane %v130, %v137
  %v140 = vmul.f32 %v128, %v138
  %v141 = vadd.f32 %v125, %v140
  %s142 = scalar_lea.vmem %s1, 16
  %v143 = vld [vmem:[%s142] sm:$0x3]
  %v144 = vunpack.c.l.bf16 %v143
  %s145 = scalar_lea.vmem %s0, 16
  %v146 = vld [vmem:[%s145] sm:$0x3]
  %v149 = vunpack.c.l.s4 857870592
  %v150 = vunpack.c.0.s8 %v149
  %v151 = vlaneseq
  %v152 = vshrl.u32 %v151, 7
  %v153 = vsub.s32 %v150, %v152
  %v154 = vrot.slane %v146, %v153
  %v156 = vmul.f32 %v144, %v154
  %v157 = vadd.f32 %v141, %v156
  %s158 = scalar_lea.vmem %s1, 18
  %v159 = vld [vmem:[%s158] sm:$0x3]
  %v160 = vunpack.c.l.bf16 %v159
  %s161 = scalar_lea.vmem %s0, 20
  %v162 = vld [vmem:[%s161] sm:$0x3]
  %v165 = vunpack.c.l.s4 857870592
  %v166 = vunpack.c.0.s8 %v165
  %v167 = vlaneseq
  %v168 = vshrl.u32 %v167, 7
  %v169 = vsub.s32 %v166, %v168
  %v170 = vrot.slane %v162, %v169
  %v172 = vmul.f32 %v160, %v170
  %v173 = vadd.f32 %v157, %v172
  %s174 = scalar_lea.vmem %s1, 20
  %v175 = vld [vmem:[%s174] sm:$0x3]
  %v176 = vunpack.c.l.bf16 %v175
  %s177 = scalar_lea.vmem %s0, 22
  %v178 = vld [vmem:[%s177] sm:$0x3]
  %v181 = vunpack.c.l.s4 857870592
  %v182 = vunpack.c.0.s8 %v181
  %v183 = vlaneseq
  %v184 = vshrl.u32 %v183, 7
  %v185 = vsub.s32 %v182, %v184
  %v186 = vrot.slane %v178, %v185
  %v188 = vmul.f32 %v176, %v186
  %v189 = vadd.f32 %v173, %v188
  %s190 = scalar_lea.vmem %s1, 22
  %v191 = vld [vmem:[%s190] sm:$0x3]
  %v192 = vunpack.c.l.bf16 %v191
  %s193 = scalar_lea.vmem %s0, 24
  %v194 = vld [vmem:[%s193] sm:$0x3]
  %v197 = vunpack.c.l.s4 857870592
  %v198 = vunpack.c.0.s8 %v197
  %v199 = vlaneseq
  %v200 = vshrl.u32 %v199, 7
  %v201 = vsub.s32 %v198, %v200
  %v202 = vrot.slane %v194, %v201
  %v204 = vmul.f32 %v192, %v202
  %v205 = vadd.f32 %v189, %v204
  %s206 = scalar_lea.vmem %s1, 24
  %v207 = vld [vmem:[%s206] sm:$0x3]
  %v208 = vunpack.c.l.bf16 %v207
  %s209 = scalar_lea.vmem %s0, 26
  %v210 = vld [vmem:[%s209] sm:$0x3]
  %v213 = vunpack.c.l.s4 857870592
  %v214 = vunpack.c.0.s8 %v213
  %v215 = vlaneseq
  %v216 = vshrl.u32 %v215, 7
  %v217 = vsub.s32 %v214, %v216
  %v218 = vrot.slane %v210, %v217
  %v220 = vmul.f32 %v208, %v218
  %v221 = vadd.f32 %v205, %v220
  %s222 = scalar_lea.vmem %s1, 26
  %v223 = vld [vmem:[%s222] sm:$0x3]
  %v224 = vunpack.c.l.bf16 %v223
  %s225 = scalar_lea.vmem %s0, 28
  %v226 = vld [vmem:[%s225] sm:$0x3]
  %v229 = vunpack.c.l.s4 857870592
  %v230 = vunpack.c.0.s8 %v229
  %v231 = vlaneseq
  %v232 = vshrl.u32 %v231, 7
  %v233 = vsub.s32 %v230, %v232
  %v234 = vrot.slane %v226, %v233
  %v236 = vmul.f32 %v224, %v234
  %v237 = vadd.f32 %v221, %v236
  %s238 = scalar_lea.vmem %s1, 28
  %v239 = vld [vmem:[%s238] sm:$0x3]
  %v240 = vunpack.c.l.bf16 %v239
  %s241 = scalar_lea.vmem %s0, 30
  %v242 = vld [vmem:[%s241] sm:$0x3]
  %v245 = vunpack.c.l.s4 857870592
  %v246 = vunpack.c.0.s8 %v245
  %v247 = vlaneseq
  %v248 = vshrl.u32 %v247, 7
  %v249 = vsub.s32 %v246, %v248
  %v250 = vrot.slane %v242, %v249
  %v252 = vmul.f32 %v240, %v250
  %v253 = vadd.f32 %v237, %v252
  %s254 = scalar_lea.vmem %s1, 30
  %v255 = vld [vmem:[%s254] sm:$0x3]
  %v256 = vunpack.c.l.bf16 %v255
  %s257 = scalar_lea.vmem %s0, 34
  %v258 = vld [vmem:[%s257] sm:$0x3]
  %v261 = vunpack.c.l.s4 857870592
  %v262 = vunpack.c.0.s8 %v261
  %v263 = vlaneseq
  %v264 = vshrl.u32 %v263, 7
  %v265 = vsub.s32 %v262, %v264
  %v266 = vrot.slane %v258, %v265
  %v268 = vmul.f32 %v256, %v266
  %v269 = vadd.f32 %v253, %v268
  %s270 = scalar_lea.vmem %s1, 32
  %v271 = vld [vmem:[%s270] sm:$0x3]
  %v272 = vunpack.c.l.bf16 %v271
  %s273 = scalar_lea.vmem %s0, 36
  %v274 = vld [vmem:[%s273] sm:$0x3]
  %v277 = vunpack.c.l.s4 857870592
  %v278 = vunpack.c.0.s8 %v277
  %v279 = vlaneseq
  %v280 = vshrl.u32 %v279, 7
  %v281 = vsub.s32 %v278, %v280
  %v282 = vrot.slane %v274, %v281
  %v284 = vmul.f32 %v272, %v282
  %v285 = vadd.f32 %v269, %v284
  %s286 = scalar_lea.vmem %s1, 34
  %v287 = vld [vmem:[%s286] sm:$0x3]
  %v288 = vunpack.c.l.bf16 %v287
  %s289 = scalar_lea.vmem %s0, 38
  %v290 = vld [vmem:[%s289] sm:$0x3]
  %v293 = vunpack.c.l.s4 857870592
  %v294 = vunpack.c.0.s8 %v293
  %v295 = vlaneseq
  %v296 = vshrl.u32 %v295, 7
  %v297 = vsub.s32 %v294, %v296
  %v298 = vrot.slane %v290, %v297
  %v300 = vmul.f32 %v288, %v298
  %v301 = vadd.f32 %v285, %v300
  %s302 = scalar_lea.vmem %s1, 36
  %v303 = vld [vmem:[%s302] sm:$0x3]
  %v304 = vunpack.c.l.bf16 %v303
  %s305 = scalar_lea.vmem %s0, 40
  %v306 = vld [vmem:[%s305] sm:$0x3]
  %v309 = vunpack.c.l.s4 857870592
  %v310 = vunpack.c.0.s8 %v309
  %v311 = vlaneseq
  %v312 = vshrl.u32 %v311, 7
  %v313 = vsub.s32 %v310, %v312
  %v314 = vrot.slane %v306, %v313
  %v316 = vmul.f32 %v304, %v314
  %v317 = vadd.f32 %v301, %v316
  %s318 = scalar_lea.vmem %s1, 38
  %v319 = vld [vmem:[%s318] sm:$0x3]
  %v320 = vunpack.c.l.bf16 %v319
  %s321 = scalar_lea.vmem %s0, 44
  %v322 = vld [vmem:[%s321] sm:$0x3]
  %v325 = vunpack.c.l.s4 857870592
  %v326 = vunpack.c.0.s8 %v325
  %v327 = vlaneseq
  %v328 = vshrl.u32 %v327, 7
  %v329 = vsub.s32 %v326, %v328
  %v330 = vrot.slane %v322, %v329
  %v332 = vmul.f32 %v320, %v330
  %v333 = vadd.f32 %v317, %v332
  %s334 = scalar_lea.vmem %s1, 40
  %v335 = vld [vmem:[%s334] sm:$0x3]
  %v336 = vunpack.c.l.bf16 %v335
  %s337 = scalar_lea.vmem %s0, 46
  %v338 = vld [vmem:[%s337] sm:$0x3]
  %v341 = vunpack.c.l.s4 857870592
  %v342 = vunpack.c.0.s8 %v341
  %v343 = vlaneseq
  %v344 = vshrl.u32 %v343, 7
  %v345 = vsub.s32 %v342, %v344
  %v346 = vrot.slane %v338, %v345
  %v348 = vmul.f32 %v336, %v346
  %v349 = vadd.f32 %v333, %v348
  %s350 = scalar_lea.vmem %s1, 42
  %v351 = vld [vmem:[%s350] sm:$0x3]
  %v352 = vunpack.c.l.bf16 %v351
  %s353 = scalar_lea.vmem %s0, 48
  %v354 = vld [vmem:[%s353] sm:$0x3]
  %v357 = vunpack.c.l.s4 857870592
  %v358 = vunpack.c.0.s8 %v357
  %v359 = vlaneseq
  %v360 = vshrl.u32 %v359, 7
  %v361 = vsub.s32 %v358, %v360
  %v362 = vrot.slane %v354, %v361
  %v364 = vmul.f32 %v352, %v362
  %v365 = vadd.f32 %v349, %v364
  %s366 = scalar_lea.vmem %s1, 44
  %v367 = vld [vmem:[%s366] sm:$0x3]
  %v368 = vunpack.c.l.bf16 %v367
  %s369 = scalar_lea.vmem %s0, 50
  %v370 = vld [vmem:[%s369] sm:$0x3]
  %v373 = vunpack.c.l.s4 857870592
  %v374 = vunpack.c.0.s8 %v373
  %v375 = vlaneseq
  %v376 = vshrl.u32 %v375, 7
  %v377 = vsub.s32 %v374, %v376
  %v378 = vrot.slane %v370, %v377
  %v380 = vmul.f32 %v368, %v378
  %v381 = vadd.f32 %v365, %v380
  %s382 = scalar_lea.vmem %s1, 46
  %v383 = vld [vmem:[%s382] sm:$0x3]
  %v384 = vunpack.c.l.bf16 %v383
  %s385 = scalar_lea.vmem %s0, 52
  %v386 = vld [vmem:[%s385] sm:$0x3]
  %v389 = vunpack.c.l.s4 857870592
  %v390 = vunpack.c.0.s8 %v389
  %v391 = vlaneseq
  %v392 = vshrl.u32 %v391, 7
  %v393 = vsub.s32 %v390, %v392
  %v394 = vrot.slane %v386, %v393
  %v396 = vmul.f32 %v384, %v394
  %v397 = vadd.f32 %v381, %v396
  %s398 = scalar_lea.vmem %s1, 48
  %v399 = vld [vmem:[%s398] sm:$0x3]
  %v400 = vunpack.c.l.bf16 %v399
  %s401 = scalar_lea.vmem %s0, 54
  %v402 = vld [vmem:[%s401] sm:$0x3]
  %v405 = vunpack.c.l.s4 857870592
  %v406 = vunpack.c.0.s8 %v405
  %v407 = vlaneseq
  %v408 = vshrl.u32 %v407, 7
  %v409 = vsub.s32 %v406, %v408
  %v410 = vrot.slane %v402, %v409
  %v412 = vmul.f32 %v400, %v410
  %v413 = vadd.f32 %v397, %v412
  %s414 = scalar_lea.vmem %s1, 50
  %v415 = vld [vmem:[%s414] sm:$0x3]
  %v416 = vunpack.c.l.bf16 %v415
  %s417 = scalar_lea.vmem %s0, 58
  %v418 = vld [vmem:[%s417] sm:$0x3]
  %v421 = vunpack.c.l.s4 857870592
  %v422 = vunpack.c.0.s8 %v421
  %v423 = vlaneseq
  %v424 = vshrl.u32 %v423, 7
  %v425 = vsub.s32 %v422, %v424
  %v426 = vrot.slane %v418, %v425
  %v428 = vmul.f32 %v416, %v426
  %v429 = vadd.f32 %v413, %v428
  %s430 = scalar_lea.vmem %s1, 52
  %v431 = vld [vmem:[%s430] sm:$0x3]
  %v432 = vunpack.c.l.bf16 %v431
  %s433 = scalar_lea.vmem %s0, 60
  %v434 = vld [vmem:[%s433] sm:$0x3]
  %v437 = vunpack.c.l.s4 857870592
  %v438 = vunpack.c.0.s8 %v437
  %v439 = vlaneseq
  %v440 = vshrl.u32 %v439, 7
  %v441 = vsub.s32 %v438, %v440
  %v442 = vrot.slane %v434, %v441
  %v444 = vmul.f32 %v432, %v442
  %v445 = vadd.f32 %v429, %v444
  %s446 = scalar_lea.vmem %s1, 54
  %v447 = vld [vmem:[%s446] sm:$0x3]
  %v448 = vunpack.c.l.bf16 %v447
  %s449 = scalar_lea.vmem %s0, 62
  %v450 = vld [vmem:[%s449] sm:$0x3]
  %v453 = vunpack.c.l.s4 857870592
  %v454 = vunpack.c.0.s8 %v453
  %v455 = vlaneseq
  %v456 = vshrl.u32 %v455, 7
  %v457 = vsub.s32 %v454, %v456
  %v458 = vrot.slane %v450, %v457
  %v460 = vmul.f32 %v448, %v458
  %v461 = vadd.f32 %v445, %v460
  %v464 = vunpack.c.l.s4 1966171168
  %v465 = vunpack.c.0.s8 %v464
  %v466 = vlaneseq
  %v467 = vshrl.u32 %v466, 7
  %v468 = vsub.s32 %v465, %v467
  %v469 = vrot.slane %v461, %v468
  %v471 = vlaneseq
  %vm472 = vcmp.ge.s32.totalorder %v471, 0
  %vm473 = vcmp.lt.s32.totalorder %v471, 256
  %vm474 = vmand %vm472, %vm473
  %475 = vst.msk [vmem:[%s4] sm:$0x3] %vm474, %v469
  %v476 = vld [vmem:[%s2] sm:$0x3]
  %v477 = vunpack.c.l.bf16 %v476
  %v478 = vld [vmem:[%s129] sm:$0x3]
  %v481 = vunpack.c.l.s4 857870592
  %v482 = vunpack.c.0.s8 %v481
  %v483 = vlaneseq
  %v484 = vshrl.u32 %v483, 7
  %v485 = vsub.s32 %v482, %v484
  %v486 = vrot.slane %v478, %v485
  %v488 = vmul.f32 %v477, %v486
  %s489 = scalar_lea.vmem %s2, 2
  %v490 = vld [vmem:[%s489] sm:$0x3]
  %v491 = vunpack.c.l.bf16 %v490
  %v492 = vld [vmem:[%s145] sm:$0x3]
  %v495 = vunpack.c.l.s4 857870592
  %v496 = vunpack.c.0.s8 %v495
  %v497 = vlaneseq
  %v498 = vshrl.u32 %v497, 7
  %v499 = vsub.s32 %v496, %v498
  %v500 = vrot.slane %v492, %v499
  %v502 = vmul.f32 %v491, %v500
  %v503 = vadd.f32 %v488, %v502
  %s504 = scalar_lea.vmem %s2, 4
  %v505 = vld [vmem:[%s504] sm:$0x3]
  %v506 = vunpack.c.l.bf16 %v505
  %v507 = vld [vmem:[%s177] sm:$0x3]
  %v510 = vunpack.c.l.s4 857870592
  %v511 = vunpack.c.0.s8 %v510
  %v512 = vlaneseq
  %v513 = vshrl.u32 %v512, 7
  %v514 = vsub.s32 %v511, %v513
  %v515 = vrot.slane %v507, %v514
  %v517 = vmul.f32 %v506, %v515
  %v518 = vadd.f32 %v503, %v517
  %s519 = scalar_lea.vmem %s2, 6
  %v520 = vld [vmem:[%s519] sm:$0x3]
  %v521 = vunpack.c.l.bf16 %v520
  %v522 = vld [vmem:[%s209] sm:$0x3]
  %v525 = vunpack.c.l.s4 857870592
  %v526 = vunpack.c.0.s8 %v525
  %v527 = vlaneseq
  %v528 = vshrl.u32 %v527, 7
  %v529 = vsub.s32 %v526, %v528
  %v530 = vrot.slane %v522, %v529
  %v532 = vmul.f32 %v521, %v530
  %v533 = vadd.f32 %v518, %v532
  %s534 = scalar_lea.vmem %s2, 8
  %v535 = vld [vmem:[%s534] sm:$0x3]
  %v536 = vunpack.c.l.bf16 %v535
  %v537 = vld [vmem:[%s273] sm:$0x3]
  %v540 = vunpack.c.l.s4 857870592
  %v541 = vunpack.c.0.s8 %v540
  %v542 = vlaneseq
  %v543 = vshrl.u32 %v542, 7
  %v544 = vsub.s32 %v541, %v543
  %v545 = vrot.slane %v537, %v544
  %v547 = vmul.f32 %v536, %v545
  %v548 = vadd.f32 %v533, %v547
  %s549 = scalar_lea.vmem %s2, 10
  %v550 = vld [vmem:[%s549] sm:$0x3]
  %v551 = vunpack.c.l.bf16 %v550
  %v552 = vld [vmem:[%s289] sm:$0x3]
  %v555 = vunpack.c.l.s4 857870592
  %v556 = vunpack.c.0.s8 %v555
  %v557 = vlaneseq
  %v558 = vshrl.u32 %v557, 7
  %v559 = vsub.s32 %v556, %v558
  %v560 = vrot.slane %v552, %v559
  %v562 = vmul.f32 %v551, %v560
  %v563 = vadd.f32 %v548, %v562
  %s564 = scalar_lea.vmem %s2, 12
  %v565 = vld [vmem:[%s564] sm:$0x3]
  %v566 = vunpack.c.l.bf16 %v565
  %v567 = vld [vmem:[%s305] sm:$0x3]
  %v570 = vunpack.c.l.s4 857870592
  %v571 = vunpack.c.0.s8 %v570
  %v572 = vlaneseq
  %v573 = vshrl.u32 %v572, 7
  %v574 = vsub.s32 %v571, %v573
  %v575 = vrot.slane %v567, %v574
  %v577 = vmul.f32 %v566, %v575
  %v578 = vadd.f32 %v563, %v577
  %s579 = scalar_lea.vmem %s2, 14
  %v580 = vld [vmem:[%s579] sm:$0x3]
  %v581 = vunpack.c.l.bf16 %v580
  %v582 = vld [vmem:[%s337] sm:$0x3]
  %v585 = vunpack.c.l.s4 857870592
  %v586 = vunpack.c.0.s8 %v585
  %v587 = vlaneseq
  %v588 = vshrl.u32 %v587, 7
  %v589 = vsub.s32 %v586, %v588
  %v590 = vrot.slane %v582, %v589
  %v592 = vmul.f32 %v581, %v590
  %v593 = vadd.f32 %v578, %v592
  %s594 = scalar_lea.vmem %s2, 16
  %v595 = vld [vmem:[%s594] sm:$0x3]
  %v596 = vunpack.c.l.bf16 %v595
  %v597 = vld [vmem:[%s369] sm:$0x3]
  %v600 = vunpack.c.l.s4 857870592
  %v601 = vunpack.c.0.s8 %v600
  %v602 = vlaneseq
  %v603 = vshrl.u32 %v602, 7
  %v604 = vsub.s32 %v601, %v603
  %v605 = vrot.slane %v597, %v604
  %v607 = vmul.f32 %v596, %v605
  %v608 = vadd.f32 %v593, %v607
  %s609 = scalar_lea.vmem %s2, 18
  %v610 = vld [vmem:[%s609] sm:$0x3]
  %v611 = vunpack.c.l.bf16 %v610
  %v612 = vld [vmem:[%s401] sm:$0x3]
  %v615 = vunpack.c.l.s4 857870592
  %v616 = vunpack.c.0.s8 %v615
  %v617 = vlaneseq
  %v618 = vshrl.u32 %v617, 7
  %v619 = vsub.s32 %v616, %v618
  %v620 = vrot.slane %v612, %v619
  %v622 = vmul.f32 %v611, %v620
  %v623 = vadd.f32 %v608, %v622
  %s624 = scalar_lea.vmem %s2, 20
  %v625 = vld [vmem:[%s624] sm:$0x3]
  %v626 = vunpack.c.l.bf16 %v625
  %v627 = vld [vmem:[%s449] sm:$0x3]
  %v630 = vunpack.c.l.s4 857870592
  %v631 = vunpack.c.0.s8 %v630
  %v632 = vlaneseq
  %v633 = vshrl.u32 %v632, 7
  %v634 = vsub.s32 %v631, %v633
  %v635 = vrot.slane %v627, %v634
  %v637 = vmul.f32 %v626, %v635
  %v638 = vadd.f32 %v623, %v637
  %v641 = vunpack.c.l.s4 1966171168
  %v642 = vunpack.c.0.s8 %v641
  %v643 = vlaneseq
  %v644 = vshrl.u32 %v643, 7
  %v645 = vsub.s32 %v642, %v644
  %v646 = vrot.slane %v638, %v645
  %s648 = scalar_lea.vmem %s4, 2
  %649 = vst.msk [vmem:[%s648] sm:$0x3] %vm474, %v646
  %v650 = vld [vmem:[%s3] sm:$0x3]
  %v651 = vunpack.c.l.bf16 %v650
  %v652 = vld [vmem:[%s81] sm:$0x3]
  %v655 = vunpack.c.l.s4 857870592
  %v656 = vunpack.c.0.s8 %v655
  %v657 = vlaneseq
  %v658 = vshrl.u32 %v657, 7
  %v659 = vsub.s32 %v656, %v658
  %v660 = vrot.slane %v652, %v659
  %v662 = vmul.f32 %v651, %v660
  %s663 = scalar_lea.vmem %s3, 2
  %v664 = vld [vmem:[%s663] sm:$0x3]
  %v665 = vunpack.c.l.bf16 %v664
  %v666 = vld [vmem:[%s129] sm:$0x3]
  %v669 = vunpack.c.l.s4 857870592
  %v670 = vunpack.c.0.s8 %v669
  %v671 = vlaneseq
  %v672 = vshrl.u32 %v671, 7
  %v673 = vsub.s32 %v670, %v672
  %v674 = vrot.slane %v666, %v673
  %v676 = vmul.f32 %v665, %v674
  %v677 = vadd.f32 %v662, %v676
  %s678 = scalar_lea.vmem %s3, 4
  %v679 = vld [vmem:[%s678] sm:$0x3]
  %v680 = vunpack.c.l.bf16 %v679
  %v681 = vld [vmem:[%s145] sm:$0x3]
  %v684 = vunpack.c.l.s4 857870592
  %v685 = vunpack.c.0.s8 %v684
  %v686 = vlaneseq
  %v687 = vshrl.u32 %v686, 7
  %v688 = vsub.s32 %v685, %v687
  %v689 = vrot.slane %v681, %v688
  %v691 = vmul.f32 %v680, %v689
  %v692 = vadd.f32 %v677, %v691
  %s693 = scalar_lea.vmem %s3, 6
  %v694 = vld [vmem:[%s693] sm:$0x3]
  %v695 = vunpack.c.l.bf16 %v694
  %s696 = scalar_lea.vmem %s0, 18
  %v697 = vld [vmem:[%s696] sm:$0x3]
  %v700 = vunpack.c.l.s4 857870592
  %v701 = vunpack.c.0.s8 %v700
  %v702 = vlaneseq
  %v703 = vshrl.u32 %v702, 7
  %v704 = vsub.s32 %v701, %v703
  %v705 = vrot.slane %v697, %v704
  %v707 = vmul.f32 %v695, %v705
  %v708 = vadd.f32 %v692, %v707
  %s709 = scalar_lea.vmem %s3, 8
  %v710 = vld [vmem:[%s709] sm:$0x3]
  %v711 = vunpack.c.l.bf16 %v710
  %v712 = vld [vmem:[%s177] sm:$0x3]
  %v715 = vunpack.c.l.s4 857870592
  %v716 = vunpack.c.0.s8 %v715
  %v717 = vlaneseq
  %v718 = vshrl.u32 %v717, 7
  %v719 = vsub.s32 %v716, %v718
  %v720 = vrot.slane %v712, %v719
  %v722 = vmul.f32 %v711, %v720
  %v723 = vadd.f32 %v708, %v722
  %s724 = scalar_lea.vmem %s3, 10
  %v725 = vld [vmem:[%s724] sm:$0x3]
  %v726 = vunpack.c.l.bf16 %v725
  %v727 = vld [vmem:[%s193] sm:$0x3]
  %v730 = vunpack.c.l.s4 857870592
  %v731 = vunpack.c.0.s8 %v730
  %v732 = vlaneseq
  %v733 = vshrl.u32 %v732, 7
  %v734 = vsub.s32 %v731, %v733
  %v735 = vrot.slane %v727, %v734
  %v737 = vmul.f32 %v726, %v735
  %v738 = vadd.f32 %v723, %v737
  %s739 = scalar_lea.vmem %s3, 12
  %v740 = vld [vmem:[%s739] sm:$0x3]
  %v741 = vunpack.c.l.bf16 %v740
  %v742 = vld [vmem:[%s209] sm:$0x3]
  %v745 = vunpack.c.l.s4 857870592
  %v746 = vunpack.c.0.s8 %v745
  %v747 = vlaneseq
  %v748 = vshrl.u32 %v747, 7
  %v749 = vsub.s32 %v746, %v748
  %v750 = vrot.slane %v742, %v749
  %v752 = vmul.f32 %v741, %v750
  %v753 = vadd.f32 %v738, %v752
  %s754 = scalar_lea.vmem %s3, 14
  %v755 = vld [vmem:[%s754] sm:$0x3]
  %v756 = vunpack.c.l.bf16 %v755
  %v757 = vld [vmem:[%s225] sm:$0x3]
  %v760 = vunpack.c.l.s4 857870592
  %v761 = vunpack.c.0.s8 %v760
  %v762 = vlaneseq
  %v763 = vshrl.u32 %v762, 7
  %v764 = vsub.s32 %v761, %v763
  %v765 = vrot.slane %v757, %v764
  %v767 = vmul.f32 %v756, %v765
  %v768 = vadd.f32 %v753, %v767
  %s769 = scalar_lea.vmem %s3, 16
  %v770 = vld [vmem:[%s769] sm:$0x3]
  %v771 = vunpack.c.l.bf16 %v770
  %v772 = vld [vmem:[%s241] sm:$0x3]
  %v775 = vunpack.c.l.s4 857870592
  %v776 = vunpack.c.0.s8 %v775
  %v777 = vlaneseq
  %v778 = vshrl.u32 %v777, 7
  %v779 = vsub.s32 %v776, %v778
  %v780 = vrot.slane %v772, %v779
  %v782 = vmul.f32 %v771, %v780
  %v783 = vadd.f32 %v768, %v782
  %s784 = scalar_lea.vmem %s3, 18
  %v785 = vld [vmem:[%s784] sm:$0x3]
  %v786 = vunpack.c.l.bf16 %v785
  %s787 = scalar_lea.vmem %s0, 32
  %v788 = vld [vmem:[%s787] sm:$0x3]
  %v791 = vunpack.c.l.s4 857870592
  %v792 = vunpack.c.0.s8 %v791
  %v793 = vlaneseq
  %v794 = vshrl.u32 %v793, 7
  %v795 = vsub.s32 %v792, %v794
  %v796 = vrot.slane %v788, %v795
  %v798 = vmul.f32 %v786, %v796
  %v799 = vadd.f32 %v783, %v798
  %s800 = scalar_lea.vmem %s3, 20
  %v801 = vld [vmem:[%s800] sm:$0x3]
  %v802 = vunpack.c.l.bf16 %v801
  %v803 = vld [vmem:[%s273] sm:$0x3]
  %v806 = vunpack.c.l.s4 857870592
  %v807 = vunpack.c.0.s8 %v806
  %v808 = vlaneseq
  %v809 = vshrl.u32 %v808, 7
  %v810 = vsub.s32 %v807, %v809
  %v811 = vrot.slane %v803, %v810
  %v813 = vmul.f32 %v802, %v811
  %v814 = vadd.f32 %v799, %v813
  %s815 = scalar_lea.vmem %s3, 22
  %v816 = vld [vmem:[%s815] sm:$0x3]
  %v817 = vunpack.c.l.bf16 %v816
  %v818 = vld [vmem:[%s289] sm:$0x3]
  %v821 = vunpack.c.l.s4 857870592
  %v822 = vunpack.c.0.s8 %v821
  %v823 = vlaneseq
  %v824 = vshrl.u32 %v823, 7
  %v825 = vsub.s32 %v822, %v824
  %v826 = vrot.slane %v818, %v825
  %v828 = vmul.f32 %v817, %v826
  %v829 = vadd.f32 %v814, %v828
  %s830 = scalar_lea.vmem %s3, 24
  %v831 = vld [vmem:[%s830] sm:$0x3]
  %v832 = vunpack.c.l.bf16 %v831
  %v833 = vld [vmem:[%s305] sm:$0x3]
  %v836 = vunpack.c.l.s4 857870592
  %v837 = vunpack.c.0.s8 %v836
  %v838 = vlaneseq
  %v839 = vshrl.u32 %v838, 7
  %v840 = vsub.s32 %v837, %v839
  %v841 = vrot.slane %v833, %v840
  %v843 = vmul.f32 %v832, %v841
  %v844 = vadd.f32 %v829, %v843
  %s845 = scalar_lea.vmem %s3, 26
  %v846 = vld [vmem:[%s845] sm:$0x3]
  %v847 = vunpack.c.l.bf16 %v846
  %s848 = scalar_lea.vmem %s0, 42
  %v849 = vld [vmem:[%s848] sm:$0x3]
  %v852 = vunpack.c.l.s4 857870592
  %v853 = vunpack.c.0.s8 %v852
  %v854 = vlaneseq
  %v855 = vshrl.u32 %v854, 7
  %v856 = vsub.s32 %v853, %v855
  %v857 = vrot.slane %v849, %v856
  %v859 = vmul.f32 %v847, %v857
  %v860 = vadd.f32 %v844, %v859
  %s861 = scalar_lea.vmem %s3, 28
  %v862 = vld [vmem:[%s861] sm:$0x3]
  %v863 = vunpack.c.l.bf16 %v862
  %v864 = vld [vmem:[%s321] sm:$0x3]
  %v867 = vunpack.c.l.s4 857870592
  %v868 = vunpack.c.0.s8 %v867
  %v869 = vlaneseq
  %v870 = vshrl.u32 %v869, 7
  %v871 = vsub.s32 %v868, %v870
  %v872 = vrot.slane %v864, %v871
  %v874 = vmul.f32 %v863, %v872
  %v875 = vadd.f32 %v860, %v874
  %s876 = scalar_lea.vmem %s3, 30
  %v877 = vld [vmem:[%s876] sm:$0x3]
  %v878 = vunpack.c.l.bf16 %v877
  %v879 = vld [vmem:[%s337] sm:$0x3]
  %v882 = vunpack.c.l.s4 857870592
  %v883 = vunpack.c.0.s8 %v882
  %v884 = vlaneseq
  %v885 = vshrl.u32 %v884, 7
  %v886 = vsub.s32 %v883, %v885
  %v887 = vrot.slane %v879, %v886
  %v889 = vmul.f32 %v878, %v887
  %v890 = vadd.f32 %v875, %v889
  %s891 = scalar_lea.vmem %s3, 32
  %v892 = vld [vmem:[%s891] sm:$0x3]
  %v893 = vunpack.c.l.bf16 %v892
  %v894 = vld [vmem:[%s353] sm:$0x3]
  %v897 = vunpack.c.l.s4 857870592
  %v898 = vunpack.c.0.s8 %v897
  %v899 = vlaneseq
  %v900 = vshrl.u32 %v899, 7
  %v901 = vsub.s32 %v898, %v900
  %v902 = vrot.slane %v894, %v901
  %v904 = vmul.f32 %v893, %v902
  %v905 = vadd.f32 %v890, %v904
  %s906 = scalar_lea.vmem %s3, 34
  %v907 = vld [vmem:[%s906] sm:$0x3]
  %v908 = vunpack.c.l.bf16 %v907
  %v909 = vld [vmem:[%s369] sm:$0x3]
  %v912 = vunpack.c.l.s4 857870592
  %v913 = vunpack.c.0.s8 %v912
  %v914 = vlaneseq
  %v915 = vshrl.u32 %v914, 7
  %v916 = vsub.s32 %v913, %v915
  %v917 = vrot.slane %v909, %v916
  %v919 = vmul.f32 %v908, %v917
  %v920 = vadd.f32 %v905, %v919
  %s921 = scalar_lea.vmem %s3, 36
  %v922 = vld [vmem:[%s921] sm:$0x3]
  %v923 = vunpack.c.l.bf16 %v922
  %v924 = vld [vmem:[%s385] sm:$0x3]
  %v927 = vunpack.c.l.s4 857870592
  %v928 = vunpack.c.0.s8 %v927
  %v929 = vlaneseq
  %v930 = vshrl.u32 %v929, 7
  %v931 = vsub.s32 %v928, %v930
  %v932 = vrot.slane %v924, %v931
  %v934 = vmul.f32 %v923, %v932
  %v935 = vadd.f32 %v920, %v934
  %s936 = scalar_lea.vmem %s3, 38
  %v937 = vld [vmem:[%s936] sm:$0x3]
  %v938 = vunpack.c.l.bf16 %v937
  %v939 = vld [vmem:[%s401] sm:$0x3]
  %v942 = vunpack.c.l.s4 857870592
  %v943 = vunpack.c.0.s8 %v942
  %v944 = vlaneseq
  %v945 = vshrl.u32 %v944, 7
  %v946 = vsub.s32 %v943, %v945
  %v947 = vrot.slane %v939, %v946
  %v949 = vmul.f32 %v938, %v947
  %v950 = vadd.f32 %v935, %v949
  %s951 = scalar_lea.vmem %s3, 40
  %v952 = vld [vmem:[%s951] sm:$0x3]
  %v953 = vunpack.c.l.bf16 %v952
  %s954 = scalar_lea.vmem %s0, 56
  %v955 = vld [vmem:[%s954] sm:$0x3]
  %v958 = vunpack.c.l.s4 857870592
  %v959 = vunpack.c.0.s8 %v958
  %v960 = vlaneseq
  %v961 = vshrl.u32 %v960, 7
  %v962 = vsub.s32 %v959, %v961
  %v963 = vrot.slane %v955, %v962
  %v965 = vmul.f32 %v953, %v963
  %v966 = vadd.f32 %v950, %v965
  %s967 = scalar_lea.vmem %s3, 42
  %v968 = vld [vmem:[%s967] sm:$0x3]
  %v969 = vunpack.c.l.bf16 %v968
  %v970 = vld [vmem:[%s433] sm:$0x3]
  %v973 = vunpack.c.l.s4 857870592
  %v974 = vunpack.c.0.s8 %v973
  %v975 = vlaneseq
  %v976 = vshrl.u32 %v975, 7
  %v977 = vsub.s32 %v974, %v976
  %v978 = vrot.slane %v970, %v977
  %v980 = vmul.f32 %v969, %v978
  %v981 = vadd.f32 %v966, %v980
  %s982 = scalar_lea.vmem %s3, 44
  %v983 = vld [vmem:[%s982] sm:$0x3]
  %v984 = vunpack.c.l.bf16 %v983
  %v985 = vld [vmem:[%s449] sm:$0x3]
  %v988 = vunpack.c.l.s4 857870592
  %v989 = vunpack.c.0.s8 %v988
  %v990 = vlaneseq
  %v991 = vshrl.u32 %v990, 7
  %v992 = vsub.s32 %v989, %v991
  %v993 = vrot.slane %v985, %v992
  %v995 = vmul.f32 %v984, %v993
  %v996 = vadd.f32 %v981, %v995
  %s997 = scalar_lea.vmem %s3, 46
  %v998 = vld [vmem:[%s997] sm:$0x3]
  %v999 = vunpack.c.l.bf16 %v998
  %s1000 = scalar_lea.vmem %s0, 64
  %v1001 = vld [vmem:[%s1000] sm:$0x3]
  %v1004 = vunpack.c.l.s4 857870592
  %v1005 = vunpack.c.0.s8 %v1004
  %v1006 = vlaneseq
  %v1007 = vshrl.u32 %v1006, 7
  %v1008 = vsub.s32 %v1005, %v1007
  %v1009 = vrot.slane %v1001, %v1008
  %v1011 = vmul.f32 %v999, %v1009
  %v1012 = vadd.f32 %v996, %v1011
  %s1013 = scalar_lea.vmem %s3, 48
  %v1014 = vld [vmem:[%s1013] sm:$0x3]
  %v1015 = vunpack.c.l.bf16 %v1014
  %s1016 = scalar_lea.vmem %s0, 66
  %v1017 = vld [vmem:[%s1016] sm:$0x3]
  %v1020 = vunpack.c.l.s4 857870592
  %v1021 = vunpack.c.0.s8 %v1020
  %v1022 = vlaneseq
  %v1023 = vshrl.u32 %v1022, 7
  %v1024 = vsub.s32 %v1021, %v1023
  %v1025 = vrot.slane %v1017, %v1024
  %v1027 = vmul.f32 %v1015, %v1025
  %v1028 = vadd.f32 %v1012, %v1027
  %s1029 = scalar_lea.vmem %s3, 50
  %v1030 = vld [vmem:[%s1029] sm:$0x3]
  %v1031 = vunpack.c.l.bf16 %v1030
  %s1032 = scalar_lea.vmem %s0, 68
  %v1033 = vld [vmem:[%s1032] sm:$0x3]
  %v1036 = vunpack.c.l.s4 857870592
  %v1037 = vunpack.c.0.s8 %v1036
  %v1038 = vlaneseq
  %v1039 = vshrl.u32 %v1038, 7
  %v1040 = vsub.s32 %v1037, %v1039
  %v1041 = vrot.slane %v1033, %v1040
  %v1043 = vmul.f32 %v1031, %v1041
  %v1044 = vadd.f32 %v1028, %v1043
  %s1045 = scalar_lea.vmem %s3, 52
  %v1046 = vld [vmem:[%s1045] sm:$0x3]
  %v1047 = vunpack.c.l.bf16 %v1046
  %s1048 = scalar_lea.vmem %s0, 70
  %v1049 = vld [vmem:[%s1048] sm:$0x3]
  %v1052 = vunpack.c.l.s4 857870592
  %v1053 = vunpack.c.0.s8 %v1052
  %v1054 = vlaneseq
  %v1055 = vshrl.u32 %v1054, 7
  %v1056 = vsub.s32 %v1053, %v1055
  %v1057 = vrot.slane %v1049, %v1056
  %v1059 = vmul.f32 %v1047, %v1057
  %v1060 = vadd.f32 %v1044, %v1059
  %s1061 = scalar_lea.vmem %s3, 54
  %v1062 = vld [vmem:[%s1061] sm:$0x3]
  %v1063 = vunpack.c.l.bf16 %v1062
  %s1064 = scalar_lea.vmem %s0, 72
  %v1065 = vld [vmem:[%s1064] sm:$0x3]
  %v1068 = vunpack.c.l.s4 857870592
  %v1069 = vunpack.c.0.s8 %v1068
  %v1070 = vlaneseq
  %v1071 = vshrl.u32 %v1070, 7
  %v1072 = vsub.s32 %v1069, %v1071
  %v1073 = vrot.slane %v1065, %v1072
  %v1075 = vmul.f32 %v1063, %v1073
  %v1076 = vadd.f32 %v1060, %v1075
  %s1077 = scalar_lea.vmem %s3, 56
  %v1078 = vld [vmem:[%s1077] sm:$0x3]
  %v1079 = vunpack.c.l.bf16 %v1078
  %s1080 = scalar_lea.vmem %s0, 74
  %v1081 = vld [vmem:[%s1080] sm:$0x3]
  %v1084 = vunpack.c.l.s4 857870592
  %v1085 = vunpack.c.0.s8 %v1084
  %v1086 = vlaneseq
  %v1087 = vshrl.u32 %v1086, 7
  %v1088 = vsub.s32 %v1085, %v1087
  %v1089 = vrot.slane %v1081, %v1088
  %v1091 = vmul.f32 %v1079, %v1089
  %v1092 = vadd.f32 %v1076, %v1091
  %s1093 = scalar_lea.vmem %s3, 58
  %v1094 = vld [vmem:[%s1093] sm:$0x3]
  %v1095 = vunpack.c.l.bf16 %v1094
  %s1096 = scalar_lea.vmem %s0, 76
  %v1097 = vld [vmem:[%s1096] sm:$0x3]
  %v1100 = vunpack.c.l.s4 857870592
  %v1101 = vunpack.c.0.s8 %v1100
  %v1102 = vlaneseq
  %v1103 = vshrl.u32 %v1102, 7
  %v1104 = vsub.s32 %v1101, %v1103
  %v1105 = vrot.slane %v1097, %v1104
  %v1107 = vmul.f32 %v1095, %v1105
  %v1108 = vadd.f32 %v1092, %v1107
  %v1111 = vunpack.c.l.s4 1966171168
  %v1112 = vunpack.c.0.s8 %v1111
  %v1113 = vlaneseq
  %v1114 = vshrl.u32 %v1113, 7
  %v1115 = vsub.s32 %v1112, %v1114
  %v1116 = vrot.slane %v1108, %v1115
  %s1118 = scalar_lea.vmem %s4, 4
  %1119 = vst.msk [vmem:[%s1118] sm:$0x3] %vm474, %v1116
  // Predicated region
  $region18: #{forward.1} parent=0 // pred_check
    _
  $region19: #{forward.1} parent=0 // pred_check_branch
    %1121 = sbr.rel (0) target = $region21
  $region20: #{forward.1} parent=0 // pred_region
    _
  $region21: #{forward.1} parent=0 // pred_fallthru
    _
  // Predicated region
  $region22: #{forward.1} parent=0 // pred_check
    _
  $region23: #{forward.1} parent=0 // pred_check_branch
    %1123 = sbr.rel (0) target = $region25
  $region24: #{forward.1} parent=0 // pred_region
    _
  $region25: #{forward.1} parent=0 // pred_fallthru
    _

</llo_original>
